<compile_context>
chip_gen: v5e
topology: v5e:2x2
jax: 0.10.0
libtpu: 0.0.40
codegen_flags: <defaults>
</compile_context>

<pallas_src>
import functools
import math

import jax
import jax.numpy as jnp
import numpy as np
from jax import lax
from jax.experimental import pallas as pl
from jax.experimental.pallas import tpu as pltpu


def _round_up(x, m):
    return ((x + m - 1) // m) * m


def _l2_normalize_kernel(x, eps=1e-12):
    # matches torch.nn.functional.normalize(x, p=2, dim=-1, eps=1e-12):
    # x / max(||x||, eps) == x * rsqrt(max(sum(x^2), eps^2))   (rsqrt -> EUP slot)
    ssq = jnp.sum(x * x, axis=-1, keepdims=True)
    return x * lax.rsqrt(jnp.maximum(ssq, eps * eps))


def _l2_normalize_ref(x, eps=1e-12):
    n = jnp.sqrt(jnp.sum(x * x, axis=-1, keepdims=True))
    return x / jnp.maximum(n, eps)


# ----------------------------------------------------------------------------- kernel


def niser_forward_kernel(a_in_ref, a_out_ref, emb_ref,
                         w_e_ref, b_e_ref, b_iah_ref, b_oah_ref,
                         w_ih_in_ref, w_ih_out_ref, w_hh_ref, b_ih_ref, b_hh_ref,
                         out_ref, hid_ref, *, hp, step, matmul_dtype):
    Hp = hp
    cast = lambda t: t.astype(matmul_dtype)

    # Per-tile block-diagonal adjacency (pre-cast host-side to matmul_dtype).
    A_in = a_in_ref[0]                          # (Mt, Mt)
    A_out = a_out_ref[0]                        # (Mt, Mt)

    # Fused, pre-transposed, pre-cast weights (loaded once per tile; constant index map).
    w_e = w_e_ref[...]                          # (Hp, 2Hp)   [edge_in | edge_out]
    w_ih_in = w_ih_in_ref[...]                  # (Hp, 3Hp)   [r | i | n] (input_in half)
    w_ih_out = w_ih_out_ref[...]                # (Hp, 3Hp)   [r | i | n] (input_out half)
    w_hh = w_hh_ref[...]                        # (Hp, 3Hp)   [r | i | n]
    b_e = b_e_ref[...]                          # (1, 2Hp) f32
    b_iah = b_iah_ref[...]                      # (1, Hp)
    b_oah = b_oah_ref[...]                      # (1, Hp)
    b_ih = b_ih_ref[...]                        # (1, 3Hp)
    b_hh = b_hh_ref[...]                        # (1, 3Hp)

    # hidden = F.normalize(item_embs, dim=-1); carried f32 in a VMEM scratch across GNN steps.
    hid_ref[...] = _l2_normalize_kernel(emb_ref[0])

    def gnn_cell(_=None):
        hidden = hid_ref[...]                                                 # (Mt, Hp) f32
        h_c = cast(hidden)

        # Fused edge linears: one (Mt,Hp)x(Hp,2Hp) dot; slices land on 128-lane boundaries.
        eh = jnp.dot(h_c, w_e, preferred_element_type=jnp.float32) + b_e      # (Mt, 2Hp) f32

        # Block-diagonal adjacency product: one big MXU dot per direction (no reshapes).
        input_in = jnp.dot(A_in, cast(eh[:, :Hp]),
                           preferred_element_type=jnp.float32) + b_iah        # (Mt, Hp)
        input_out = jnp.dot(A_out, cast(eh[:, Hp:]),
                            preferred_element_type=jnp.float32) + b_oah       # (Mt, Hp)

        # Fused GRU-style gates (N = 3Hp fills the MXU columns).
        gi = (jnp.dot(cast(input_in), w_ih_in, preferred_element_type=jnp.float32)
              + jnp.dot(cast(input_out), w_ih_out, preferred_element_type=jnp.float32)
              + b_ih)                                                          # (Mt, 3Hp)
        gh = jnp.dot(h_c, w_hh, preferred_element_type=jnp.float32) + b_hh     # (Mt, 3Hp)

        # Consume each gate right after its (128-aligned) lane slice to keep live temps low.
        resetgate = jax.nn.sigmoid(gi[:, :Hp] + gh[:, :Hp])
        inputgate = jax.nn.sigmoid(gi[:, Hp:2 * Hp] + gh[:, Hp:2 * Hp])
        newgate = jnp.tanh(gi[:, 2 * Hp:] + resetgate * gh[:, 2 * Hp:])
        hid_ref[...] = newgate + inputgate * (hidden - newgate)

    if step <= 4:
        for _ in range(step):           # typical NISER step is 1-2: static unroll
            gnn_cell()
    else:
        pl.loop(0, step)(gnn_cell)      # bound code size / live ranges for large step

    # hidden = F.normalize(gnn_out, dim=-1)
    out_ref[...] = _l2_normalize_kernel(hid_ref[...])[None, :, :]


# ----------------------------------------------------------------------------- host wrapper


def _block_diag_tiles(a, n_tiles, bt):
    """(n_tiles*bt, Sp, Sp) -> (n_tiles, bt*Sp, bt*Sp) block-diagonal per batch tile."""
    sp = a.shape[-1]
    a_t = a.reshape(n_tiles, bt, sp, sp)
    eye = jnp.eye(bt, dtype=a.dtype)
    bd = jnp.einsum("tirc,ij->tirjc", a_t, eye)
    return bd.reshape(n_tiles, bt * sp, bt * sp)


def niser_forward(item_ids, A, params, *, step, bt=None, matmul_dtype=jnp.bfloat16):
    """NISER.forward(inputs, A): embedding gather is plain-JAX glue; the rest runs in-kernel."""
    f32 = jnp.float32
    emb = params["embedding"][item_ids].astype(f32)                  # (B, S, H) gather (glue)
    B, S, H = emb.shape
    assert A.shape == (B, S, 2 * S)

    Hp = _round_up(H, 128)               # lane-dense hidden dim
    Sp = _round_up(S, 8)                 # sublane-aligned sequence dim

    # ---- batch tiling: Mt = bt*Sp rows per grid step (~512 target; keep >= 2 tiles for v7x) ----
    if bt is None:
        bt = max(1, 512 // Sp)
        bt = min(bt, max(1, pl.cdiv(B, 2)))
    n_tiles = pl.cdiv(B, bt)
    Bp = n_tiles * bt
    Mt = bt * Sp

    # ---- host-side prep: zero-pad, block-diagonalize A, fuse + pre-transpose + pre-cast W ----
    emb = jnp.pad(emb, ((0, Bp - B), (0, Sp - S), (0, Hp - H))).reshape(n_tiles, Mt, Hp)

    A = A.astype(f32)
    A_in = jnp.pad(A[:, :, :S], ((0, Bp - B), (0, Sp - S), (0, Sp - S)))
    A_out = jnp.pad(A[:, :, S:], ((0, Bp - B), (0, Sp - S), (0, Sp - S)))
    A_in = _block_diag_tiles(A_in, n_tiles, bt).astype(matmul_dtype)          # (n_tiles, Mt, Mt)
    A_out = _block_diag_tiles(A_out, n_tiles, bt).astype(matmul_dtype)

    def padw(w):   # (H, H) weight in (in, out) layout -> zero-padded (Hp, Hp)
        return jnp.pad(w, ((0, Hp - w.shape[0]), (0, Hp - w.shape[1])))

    def padb(b):   # (H,) -> (Hp,)
        return jnp.pad(b, ((0, Hp - b.shape[0]),))

    w_ih, w_hh = params["w_ih"], params["w_hh"]                               # (3H, 2H), (3H, H)
    # Fused along the output/lane dim so each per-gate slice lands on a 128 boundary.
    w_e = jnp.concatenate([padw(params["w_edge_in"].T),
                           padw(params["w_edge_out"].T)], axis=1)                          # (Hp, 2Hp)
    w_ih_in = jnp.concatenate([padw(w_ih[g * H:(g + 1) * H, :H].T) for g in range(3)], 1)  # (Hp, 3Hp)
    w_ih_out = jnp.concatenate([padw(w_ih[g * H:(g + 1) * H, H:].T) for g in range(3)], 1)  # (Hp, 3Hp)
    w_hh_f = jnp.concatenate([padw(w_hh[g * H:(g + 1) * H, :].T) for g in range(3)], 1)     # (Hp, 3Hp)
    b_e = jnp.concatenate([padb(params["b_edge_in"]), padb(params["b_edge_out"])])[None]    # (1, 2Hp)
    b_ih_f = jnp.concatenate([padb(params["b_ih"][g * H:(g + 1) * H]) for g in range(3)])[None]
    b_hh_f = jnp.concatenate([padb(params["b_hh"][g * H:(g + 1) * H]) for g in range(3)])[None]
    b_iah = padb(params["b_iah"])[None]                                                     # (1, Hp)
    b_oah = padb(params["b_oah"])[None]

    w_e = w_e.astype(matmul_dtype)
    w_ih_in = w_ih_in.astype(matmul_dtype)
    w_ih_out = w_ih_out.astype(matmul_dtype)
    w_hh_f = w_hh_f.astype(matmul_dtype)

    kern = functools.partial(niser_forward_kernel, hp=Hp, step=step, matmul_dtype=matmul_dtype)

    def tile_spec(shape):      # per-tile (1, x, y) block, advanced along the grid axis
        return pl.BlockSpec((1,) + tuple(shape[1:]), lambda b: (b, 0, 0))

    def rep_spec(shape):       # replicated weight/bias block (constant index map)
        zeros = (0,) * len(shape)
        return pl.BlockSpec(tuple(shape), lambda b, z=zeros: z)

    out = pl.pallas_call(
        kern,
        out_shape=jax.ShapeDtypeStruct((n_tiles, Mt, Hp), f32),
        grid=(n_tiles,),
        in_specs=[
            tile_spec(A_in.shape),       # block-diag A_in
            tile_spec(A_out.shape),      # block-diag A_out
            tile_spec(emb.shape),        # item embeddings
            rep_spec(w_e.shape), rep_spec(b_e.shape),
            rep_spec(b_iah.shape), rep_spec(b_oah.shape),
            rep_spec(w_ih_in.shape), rep_spec(w_ih_out.shape), rep_spec(w_hh_f.shape),
            rep_spec(b_ih_f.shape), rep_spec(b_hh_f.shape),
        ],
        out_specs=tile_spec((n_tiles, Mt, Hp)),
        scratch_shapes=[pltpu.VMEM((Mt, Hp), f32)],          # hidden state across GNN steps
        compiler_params=pltpu.CompilerParams(dimension_semantics=("parallel",)),
    )(A_in, A_out, emb, w_e, b_e, b_iah, b_oah, w_ih_in, w_ih_out, w_hh_f, b_ih_f, b_hh_f)

    return out.reshape(Bp, Sp, Hp)[:B, :S, :H]


# ----------------------------------------------------------------------------- pure-JAX reference


def niser_forward_ref(item_ids, A, params, *, step, matmul_dtype=jnp.float32):
    """Pure-JAX reference mirroring the PyTorch forward; `matmul_dtype` mimics the kernel's
    MXU-input precision (f32 accumulation) for apples-to-apples bf16 comparison."""
    f32 = jnp.float32
    c = lambda t: t.astype(matmul_dtype)
    emb = params["embedding"][item_ids].astype(f32)
    hidden = _l2_normalize_ref(emb)
    B, S, H = emb.shape
    A = A.astype(f32)
    A_in, A_out = c(A[:, :, :S]), c(A[:, :, S:2 * S])
    w_ein, w_eout = c(params["w_edge_in"].T), c(params["w_edge_out"].T)
    w_ih_in = c(params["w_ih"][:, :H].T)     # (H, 3H)
    w_ih_out = c(params["w_ih"][:, H:].T)    # (H, 3H)
    w_hh = c(params["w_hh"].T)               # (H, 3H)
    for _ in range(step):
        h_c = c(hidden)
        eh_in = jnp.einsum("bsh,hk->bsk", h_c, w_ein,
                           preferred_element_type=f32) + params["b_edge_in"]
        eh_out = jnp.einsum("bsh,hk->bsk", h_c, w_eout,
                            preferred_element_type=f32) + params["b_edge_out"]
        input_in = jnp.einsum("bij,bjh->bih", A_in, c(eh_in),
                              preferred_element_type=f32) + params["b_iah"]
        input_out = jnp.einsum("bij,bjh->bih", A_out, c(eh_out),
                               preferred_element_type=f32) + params["b_oah"]
        gi = (jnp.einsum("bsh,hk->bsk", c(input_in), w_ih_in, preferred_element_type=f32)
              + jnp.einsum("bsh,hk->bsk", c(input_out), w_ih_out, preferred_element_type=f32)
              + params["b_ih"])
        gh = jnp.einsum("bsh,hk->bsk", h_c, w_hh, preferred_element_type=f32) + params["b_hh"]
        i_r, i_i, i_n = jnp.split(gi, 3, axis=2)
        h_r, h_i, h_n = jnp.split(gh, 3, axis=2)
        resetgate = jax.nn.sigmoid(i_r + h_r)
        inputgate = jax.nn.sigmoid(i_i + h_i)
        newgate = jnp.tanh(i_n + resetgate * h_n)
        hidden = newgate + inputgate * (hidden - newgate)
    return _l2_normalize_ref(hidden)


def init_params(key, *, n_node, hidden_size):
    """Deterministic init matching NISER.reset_parameters: uniform(-stdv, stdv), stdv=1/sqrt(H)."""
    H = hidden_size
    stdv = 1.0 / math.sqrt(H)
    shapes = {
        "embedding": (n_node, H),
        "w_edge_in": (H, H), "b_edge_in": (H,),
        "w_edge_out": (H, H), "b_edge_out": (H,),
        "b_iah": (H,), "b_oah": (H,),
        "w_ih": (3 * H, 2 * H), "b_ih": (3 * H,),
        "w_hh": (3 * H, H), "b_hh": (3 * H,),
    }
    params = {}
    keys = jax.random.split(key, len(shapes))
    for k, (name, shp) in zip(keys, sorted(shapes.items())):
        params[name] = jax.random.uniform(k, shp, jnp.float32, minval=-stdv, maxval=stdv)
    return params


if __name__ == "__main__":
    # Small shapes consistent with the module's forward:
    #   inputs: (batch, seq) int item ids ; A: (batch, seq, 2*seq) float adjacency
    B, S, H = 8, 8, 32
    N_NODE, STEP = 50, 2

    key = jax.random.PRNGKey(0)
    k_param, k_ids, k_A = jax.random.split(key, 3)

    params = init_params(k_param, n_node=N_NODE, hidden_size=H)
    item_ids = jax.random.randint(k_ids, (B, S), 0, N_NODE)
    A = jax.random.uniform(k_A, (B, S, 2 * S), jnp.float32)

    # Default path: bf16 MXU inputs (v6e/v7x throughput), f32 accumulation & gate math.
    out_bf16 = jax.block_until_ready(niser_forward(item_ids, A, params, step=STEP))
    # f32 MXU inputs for a tight numerical check against the pure-f32 reference.
    out_f32 = jax.block_until_ready(
        niser_forward(item_ids, A, params, step=STEP, matmul_dtype=jnp.float32))

    ref_f32 = niser_forward_ref(item_ids, A, params, step=STEP, matmul_dtype=jnp.float32)
    ref_bf16 = niser_forward_ref(item_ids, A, params, step=STEP, matmul_dtype=jnp.bfloat16)

    np.testing.assert_allclose(np.asarray(out_f32), np.asarray(ref_f32), rtol=2e-4, atol=2e-5)
    # bf16 MXU inputs: compare against a reference that mimics the same operand precision
    # (bf16 operands, f32 accumulation); the remaining gap is accumulation-order / rsqrt noise.
    np.testing.assert_allclose(np.asarray(out_bf16), np.asarray(ref_bf16), rtol=1e-2, atol=1e-3)

    print("KERNEL_OK")
</pallas_src>

<mosaic_0001>
module attributes {stable_mosaic.version = 11 : i64} {
  func.func @niser_forward_kernel(%arg0: i32, %arg1: memref<1x32x32xbf16, #tpu.memory_space<vmem>>, %arg2: memref<1x32x32xbf16, #tpu.memory_space<vmem>>, %arg3: memref<1x32x128xf32, #tpu.memory_space<vmem>>, %arg4: memref<128x256xbf16, #tpu.memory_space<vmem>>, %arg5: memref<1x256xf32, #tpu.memory_space<vmem>>, %arg6: memref<1x128xf32, #tpu.memory_space<vmem>>, %arg7: memref<1x128xf32, #tpu.memory_space<vmem>>, %arg8: memref<128x384xbf16, #tpu.memory_space<vmem>>, %arg9: memref<128x384xbf16, #tpu.memory_space<vmem>>, %arg10: memref<128x384xbf16, #tpu.memory_space<vmem>>, %arg11: memref<1x384xf32, #tpu.memory_space<vmem>>, %arg12: memref<1x384xf32, #tpu.memory_space<vmem>>, %arg13: memref<1x32x128xf32, #tpu.memory_space<vmem>>, %arg14: memref<32x128xf32, #tpu.memory_space<vmem>>) attributes {dimension_semantics = [#tpu.dimension_semantics<parallel>], iteration_bounds = array<i64: 2>, scalar_prefetch = 0 : i64, scratch_operands = 1 : i64, tpu.core_type = #tpu.core_type<tc>, window_params = [{transform_indices = @transform_0, window_bounds = array<i64: 1, 32, 32>}, {transform_indices = @transform_1, window_bounds = array<i64: 1, 32, 32>}, {transform_indices = @transform_2, window_bounds = array<i64: 1, 32, 128>}, {pipeline_mode = #tpu.pipeline_mode<synchronous>, transform_indices = @transform_3, window_bounds = array<i64: 128, 256>}, {pipeline_mode = #tpu.pipeline_mode<synchronous>, transform_indices = @transform_4, window_bounds = array<i64: 1, 256>}, {pipeline_mode = #tpu.pipeline_mode<synchronous>, transform_indices = @transform_5, window_bounds = array<i64: 1, 128>}, {pipeline_mode = #tpu.pipeline_mode<synchronous>, transform_indices = @transform_6, window_bounds = array<i64: 1, 128>}, {pipeline_mode = #tpu.pipeline_mode<synchronous>, transform_indices = @transform_7, window_bounds = array<i64: 128, 384>}, {pipeline_mode = #tpu.pipeline_mode<synchronous>, transform_indices = @transform_8, window_bounds = array<i64: 128, 384>}, {pipeline_mode = #tpu.pipeline_mode<synchronous>, transform_indices = @transform_9, window_bounds = array<i64: 128, 384>}, {pipeline_mode = #tpu.pipeline_mode<synchronous>, transform_indices = @transform_10, window_bounds = array<i64: 1, 384>}, {pipeline_mode = #tpu.pipeline_mode<synchronous>, transform_indices = @transform_11, window_bounds = array<i64: 1, 384>}, {transform_indices = @transform_12, window_bounds = array<i64: 1, 32, 128>}]} {
    %c0 = arith.constant 0 : index
    %c0_0 = arith.constant 0 : index
    %c0_1 = arith.constant 0 : index
    %0 = vector.load %arg1[%c0, %c0_0, %c0_1] : memref<1x32x32xbf16, #tpu.memory_space<vmem>>, vector<1x32x32xbf16>
    %1 = vector.shape_cast %0 : vector<1x32x32xbf16> to vector<32x32xbf16>
    %c0_2 = arith.constant 0 : index
    %c0_3 = arith.constant 0 : index
    %c0_4 = arith.constant 0 : index
    %2 = vector.load %arg2[%c0_2, %c0_3, %c0_4] : memref<1x32x32xbf16, #tpu.memory_space<vmem>>, vector<1x32x32xbf16>
    %3 = vector.shape_cast %2 : vector<1x32x32xbf16> to vector<32x32xbf16>
    %c0_5 = arith.constant 0 : index
    %c0_6 = arith.constant 0 : index
    %4 = vector.load %arg4[%c0_5, %c0_6] : memref<128x256xbf16, #tpu.memory_space<vmem>>, vector<128x256xbf16>
    %c0_7 = arith.constant 0 : index
    %c0_8 = arith.constant 0 : index
    %5 = vector.load %arg8[%c0_7, %c0_8] : memref<128x384xbf16, #tpu.memory_space<vmem>>, vector<128x384xbf16>
    %c0_9 = arith.constant 0 : index
    %c0_10 = arith.constant 0 : index
    %6 = vector.load %arg9[%c0_9, %c0_10] : memref<128x384xbf16, #tpu.memory_space<vmem>>, vector<128x384xbf16>
    %c0_11 = arith.constant 0 : index
    %c0_12 = arith.constant 0 : index
    %7 = vector.load %arg10[%c0_11, %c0_12] : memref<128x384xbf16, #tpu.memory_space<vmem>>, vector<128x384xbf16>
    %c0_13 = arith.constant 0 : index
    %c0_14 = arith.constant 0 : index
    %8 = vector.load %arg5[%c0_13, %c0_14] : memref<1x256xf32, #tpu.memory_space<vmem>>, vector<1x256xf32>
    %c0_15 = arith.constant 0 : index
    %c0_16 = arith.constant 0 : index
    %9 = vector.load %arg6[%c0_15, %c0_16] : memref<1x128xf32, #tpu.memory_space<vmem>>, vector<1x128xf32>
    %c0_17 = arith.constant 0 : index
    %c0_18 = arith.constant 0 : index
    %10 = vector.load %arg7[%c0_17, %c0_18] : memref<1x128xf32, #tpu.memory_space<vmem>>, vector<1x128xf32>
    %c0_19 = arith.constant 0 : index
    %c0_20 = arith.constant 0 : index
    %11 = vector.load %arg11[%c0_19, %c0_20] : memref<1x384xf32, #tpu.memory_space<vmem>>, vector<1x384xf32>
    %c0_21 = arith.constant 0 : index
    %c0_22 = arith.constant 0 : index
    %12 = vector.load %arg12[%c0_21, %c0_22] : memref<1x384xf32, #tpu.memory_space<vmem>>, vector<1x384xf32>
    %c0_23 = arith.constant 0 : index
    %c0_24 = arith.constant 0 : index
    %c0_25 = arith.constant 0 : index
    %13 = vector.load %arg3[%c0_23, %c0_24, %c0_25] : memref<1x32x128xf32, #tpu.memory_space<vmem>>, vector<1x32x128xf32>
    %14 = vector.shape_cast %13 : vector<1x32x128xf32> to vector<32x128xf32>
    %15 = arith.mulf %14, %14 : vector<32x128xf32>
    %cst = arith.constant dense<0.000000e+00> : vector<32xf32>
    %16 = vector.multi_reduction <add>, %15, %cst [1] : vector<32x128xf32> to vector<32xf32>
    %17 = vector.shape_cast %16 : vector<32xf32> to vector<32x1xf32>
    %cst_26 = arith.constant 1.000000e-24 : f32
    %18 = vector.broadcast %cst_26 : f32 to vector<32x1xf32>
    %19 = arith.maximumf %17, %18 : vector<32x1xf32>
    %20 = math.rsqrt %19 : vector<32x1xf32>
    %21 = vector.broadcast %20 : vector<32x1xf32> to vector<32x128xf32>
    %22 = arith.mulf %14, %21 : vector<32x128xf32>
    %c0_27 = arith.constant 0 : index
    %c0_28 = arith.constant 0 : index
    %23 = vector.load %arg14[%c0_27, %c0_28] : memref<32x128xf32, #tpu.memory_space<vmem>>, vector<32x128xf32>
    tpu.vector_store %arg14[%c0_27, %c0_28], %22 {strides = array<i32>} : memref<32x128xf32, #tpu.memory_space<vmem>>, vector<32x128xf32>,
    %c0_29 = arith.constant 0 : index
    %c0_30 = arith.constant 0 : index
    %24 = vector.load %arg14[%c0_29, %c0_30] : memref<32x128xf32, #tpu.memory_space<vmem>>, vector<32x128xf32>
    %25 = arith.truncf %24 : vector<32x128xf32> to vector<32x128xbf16>
    %cst_31 = arith.constant dense<0.000000e+00> : vector<32x256xf32>
    %26 = tpu.matmul %25, %4, %cst_31 {dimension_numbers = #tpu.dot_dimension_numbers<[1], [0], [0], [1], [0, 0, 1, 1], [], []>} : vector<32x128xbf16>, vector<128x256xbf16>, vector<32x256xf32> -> vector<32x256xf32>
    %27 = vector.broadcast %8 : vector<1x256xf32> to vector<32x256xf32>
    %28 = arith.addf %26, %27 : vector<32x256xf32>
    %29 = vector.extract_strided_slice %28 {offsets = [0, 0], sizes = [32, 128], strides = [1, 1]} : vector<32x256xf32> to vector<32x128xf32>
    %30 = arith.truncf %29 : vector<32x128xf32> to vector<32x128xbf16>
    %cst_32 = arith.constant dense<0.000000e+00> : vector<32x128xf32>
    %31 = tpu.matmul %1, %30, %cst_32 {dimension_numbers = #tpu.dot_dimension_numbers<[1], [0], [0], [1], [0, 0, 1, 1], [], []>} : vector<32x32xbf16>, vector<32x128xbf16>, vector<32x128xf32> -> vector<32x128xf32>
    %32 = vector.broadcast %9 : vector<1x128xf32> to vector<32x128xf32>
    %33 = arith.addf %31, %32 : vector<32x128xf32>
    %34 = vector.extract_strided_slice %28 {offsets = [0, 128], sizes = [32, 128], strides = [1, 1]} : vector<32x256xf32> to vector<32x128xf32>
    %35 = arith.truncf %34 : vector<32x128xf32> to vector<32x128xbf16>
    %cst_33 = arith.constant dense<0.000000e+00> : vector<32x128xf32>
    %36 = tpu.matmul %3, %35, %cst_33 {dimension_numbers = #tpu.dot_dimension_numbers<[1], [0], [0], [1], [0, 0, 1, 1], [], []>} : vector<32x32xbf16>, vector<32x128xbf16>, vector<32x128xf32> -> vector<32x128xf32>
    %37 = vector.broadcast %10 : vector<1x128xf32> to vector<32x128xf32>
    %38 = arith.addf %36, %37 : vector<32x128xf32>
    %39 = arith.truncf %33 : vector<32x128xf32> to vector<32x128xbf16>
    %cst_34 = arith.constant dense<0.000000e+00> : vector<32x384xf32>
    %40 = tpu.matmul %39, %5, %cst_34 {dimension_numbers = #tpu.dot_dimension_numbers<[1], [0], [0], [1], [0, 0, 1, 1], [], []>} : vector<32x128xbf16>, vector<128x384xbf16>, vector<32x384xf32> -> vector<32x384xf32>
    %41 = arith.truncf %38 : vector<32x128xf32> to vector<32x128xbf16>
    %cst_35 = arith.constant dense<0.000000e+00> : vector<32x384xf32>
    %42 = tpu.matmul %41, %6, %cst_35 {dimension_numbers = #tpu.dot_dimension_numbers<[1], [0], [0], [1], [0, 0, 1, 1], [], []>} : vector<32x128xbf16>, vector<128x384xbf16>, vector<32x384xf32> -> vector<32x384xf32>
    %43 = arith.addf %40, %42 : vector<32x384xf32>
    %44 = vector.broadcast %11 : vector<1x384xf32> to vector<32x384xf32>
    %45 = arith.addf %43, %44 : vector<32x384xf32>
    %cst_36 = arith.constant dense<0.000000e+00> : vector<32x384xf32>
    %46 = tpu.matmul %25, %7, %cst_36 {dimension_numbers = #tpu.dot_dimension_numbers<[1], [0], [0], [1], [0, 0, 1, 1], [], []>} : vector<32x128xbf16>, vector<128x384xbf16>, vector<32x384xf32> -> vector<32x384xf32>
    %47 = vector.broadcast %12 : vector<1x384xf32> to vector<32x384xf32>
    %48 = arith.addf %46, %47 : vector<32x384xf32>
    %49 = vector.extract_strided_slice %45 {offsets = [0, 0], sizes = [32, 128], strides = [1, 1]} : vector<32x384xf32> to vector<32x128xf32>
    %50 = vector.extract_strided_slice %48 {offsets = [0, 0], sizes = [32, 128], strides = [1, 1]} : vector<32x384xf32> to vector<32x128xf32>
    %51 = arith.addf %49, %50 : vector<32x128xf32>
    %52 = arith.negf %51 : vector<32x128xf32>
    %53 = math.exp %52 : vector<32x128xf32>
    %cst_37 = arith.constant 1.000000e+00 : f32
    %54 = vector.broadcast %cst_37 : f32 to vector<32x128xf32>
    %55 = arith.addf %54, %53 : vector<32x128xf32>
    %56 = arith.divf %54, %55 : vector<32x128xf32>
    %57 = vector.extract_strided_slice %45 {offsets = [0, 128], sizes = [32, 128], strides = [1, 1]} : vector<32x384xf32> to vector<32x128xf32>
    %58 = vector.extract_strided_slice %48 {offsets = [0, 128], sizes = [32, 128], strides = [1, 1]} : vector<32x384xf32> to vector<32x128xf32>
    %59 = arith.addf %57, %58 : vector<32x128xf32>
    %60 = arith.negf %59 : vector<32x128xf32>
    %61 = math.exp %60 : vector<32x128xf32>
    %cst_38 = arith.constant 1.000000e+00 : f32
    %62 = vector.broadcast %cst_38 : f32 to vector<32x128xf32>
    %63 = arith.addf %62, %61 : vector<32x128xf32>
    %64 = arith.divf %62, %63 : vector<32x128xf32>
    %65 = vector.extract_strided_slice %45 {offsets = [0, 256], sizes = [32, 128], strides = [1, 1]} : vector<32x384xf32> to vector<32x128xf32>
    %66 = vector.extract_strided_slice %48 {offsets = [0, 256], sizes = [32, 128], strides = [1, 1]} : vector<32x384xf32> to vector<32x128xf32>
    %67 = arith.mulf %56, %66 : vector<32x128xf32>
    %68 = arith.addf %65, %67 : vector<32x128xf32>
    %69 = math.tanh %68 : vector<32x128xf32>
    %70 = arith.subf %24, %69 : vector<32x128xf32>
    %71 = arith.mulf %64, %70 : vector<32x128xf32>
    %72 = arith.addf %69, %71 : vector<32x128xf32>
    %c0_39 = arith.constant 0 : index
    %c0_40 = arith.constant 0 : index
    %73 = vector.load %arg14[%c0_39, %c0_40] : memref<32x128xf32, #tpu.memory_space<vmem>>, vector<32x128xf32>
    tpu.vector_store %arg14[%c0_39, %c0_40], %72 {strides = array<i32>} : memref<32x128xf32, #tpu.memory_space<vmem>>, vector<32x128xf32>,
    %c0_41 = arith.constant 0 : index
    %c0_42 = arith.constant 0 : index
    %74 = vector.load %arg14[%c0_41, %c0_42] : memref<32x128xf32, #tpu.memory_space<vmem>>, vector<32x128xf32>
    %75 = arith.truncf %74 : vector<32x128xf32> to vector<32x128xbf16>
    %cst_43 = arith.constant dense<0.000000e+00> : vector<32x256xf32>
    %76 = tpu.matmul %75, %4, %cst_43 {dimension_numbers = #tpu.dot_dimension_numbers<[1], [0], [0], [1], [0, 0, 1, 1], [], []>} : vector<32x128xbf16>, vector<128x256xbf16>, vector<32x256xf32> -> vector<32x256xf32>
    %77 = vector.broadcast %8 : vector<1x256xf32> to vector<32x256xf32>
    %78 = arith.addf %76, %77 : vector<32x256xf32>
    %79 = vector.extract_strided_slice %78 {offsets = [0, 0], sizes = [32, 128], strides = [1, 1]} : vector<32x256xf32> to vector<32x128xf32>
    %80 = arith.truncf %79 : vector<32x128xf32> to vector<32x128xbf16>
    %cst_44 = arith.constant dense<0.000000e+00> : vector<32x128xf32>
    %81 = tpu.matmul %1, %80, %cst_44 {dimension_numbers = #tpu.dot_dimension_numbers<[1], [0], [0], [1], [0, 0, 1, 1], [], []>} : vector<32x32xbf16>, vector<32x128xbf16>, vector<32x128xf32> -> vector<32x128xf32>
    %82 = vector.broadcast %9 : vector<1x128xf32> to vector<32x128xf32>
    %83 = arith.addf %81, %82 : vector<32x128xf32>
    %84 = vector.extract_strided_slice %78 {offsets = [0, 128], sizes = [32, 128], strides = [1, 1]} : vector<32x256xf32> to vector<32x128xf32>
    %85 = arith.truncf %84 : vector<32x128xf32> to vector<32x128xbf16>
    %cst_45 = arith.constant dense<0.000000e+00> : vector<32x128xf32>
    %86 = tpu.matmul %3, %85, %cst_45 {dimension_numbers = #tpu.dot_dimension_numbers<[1], [0], [0], [1], [0, 0, 1, 1], [], []>} : vector<32x32xbf16>, vector<32x128xbf16>, vector<32x128xf32> -> vector<32x128xf32>
    %87 = vector.broadcast %10 : vector<1x128xf32> to vector<32x128xf32>
    %88 = arith.addf %86, %87 : vector<32x128xf32>
    %89 = arith.truncf %83 : vector<32x128xf32> to vector<32x128xbf16>
    %cst_46 = arith.constant dense<0.000000e+00> : vector<32x384xf32>
    %90 = tpu.matmul %89, %5, %cst_46 {dimension_numbers = #tpu.dot_dimension_numbers<[1], [0], [0], [1], [0, 0, 1, 1], [], []>} : vector<32x128xbf16>, vector<128x384xbf16>, vector<32x384xf32> -> vector<32x384xf32>
    %91 = arith.truncf %88 : vector<32x128xf32> to vector<32x128xbf16>
    %cst_47 = arith.constant dense<0.000000e+00> : vector<32x384xf32>
    %92 = tpu.matmul %91, %6, %cst_47 {dimension_numbers = #tpu.dot_dimension_numbers<[1], [0], [0], [1], [0, 0, 1, 1], [], []>} : vector<32x128xbf16>, vector<128x384xbf16>, vector<32x384xf32> -> vector<32x384xf32>
    %93 = arith.addf %90, %92 : vector<32x384xf32>
    %94 = vector.broadcast %11 : vector<1x384xf32> to vector<32x384xf32>
    %95 = arith.addf %93, %94 : vector<32x384xf32>
    %cst_48 = arith.constant dense<0.000000e+00> : vector<32x384xf32>
    %96 = tpu.matmul %75, %7, %cst_48 {dimension_numbers = #tpu.dot_dimension_numbers<[1], [0], [0], [1], [0, 0, 1, 1], [], []>} : vector<32x128xbf16>, vector<128x384xbf16>, vector<32x384xf32> -> vector<32x384xf32>
    %97 = vector.broadcast %12 : vector<1x384xf32> to vector<32x384xf32>
    %98 = arith.addf %96, %97 : vector<32x384xf32>
    %99 = vector.extract_strided_slice %95 {offsets = [0, 0], sizes = [32, 128], strides = [1, 1]} : vector<32x384xf32> to vector<32x128xf32>
    %100 = vector.extract_strided_slice %98 {offsets = [0, 0], sizes = [32, 128], strides = [1, 1]} : vector<32x384xf32> to vector<32x128xf32>
    %101 = arith.addf %99, %100 : vector<32x128xf32>
    %102 = arith.negf %101 : vector<32x128xf32>
    %103 = math.exp %102 : vector<32x128xf32>
    %cst_49 = arith.constant 1.000000e+00 : f32
    %104 = vector.broadcast %cst_49 : f32 to vector<32x128xf32>
    %105 = arith.addf %104, %103 : vector<32x128xf32>
    %106 = arith.divf %104, %105 : vector<32x128xf32>
    %107 = vector.extract_strided_slice %95 {offsets = [0, 128], sizes = [32, 128], strides = [1, 1]} : vector<32x384xf32> to vector<32x128xf32>
    %108 = vector.extract_strided_slice %98 {offsets = [0, 128], sizes = [32, 128], strides = [1, 1]} : vector<32x384xf32> to vector<32x128xf32>
    %109 = arith.addf %107, %108 : vector<32x128xf32>
    %110 = arith.negf %109 : vector<32x128xf32>
    %111 = math.exp %110 : vector<32x128xf32>
    %cst_50 = arith.constant 1.000000e+00 : f32
    %112 = vector.broadcast %cst_50 : f32 to vector<32x128xf32>
    %113 = arith.addf %112, %111 : vector<32x128xf32>
    %114 = arith.divf %112, %113 : vector<32x128xf32>
    %115 = vector.extract_strided_slice %95 {offsets = [0, 256], sizes = [32, 128], strides = [1, 1]} : vector<32x384xf32> to vector<32x128xf32>
    %116 = vector.extract_strided_slice %98 {offsets = [0, 256], sizes = [32, 128], strides = [1, 1]} : vector<32x384xf32> to vector<32x128xf32>
    %117 = arith.mulf %106, %116 : vector<32x128xf32>
    %118 = arith.addf %115, %117 : vector<32x128xf32>
    %119 = math.tanh %118 : vector<32x128xf32>
    %120 = arith.subf %74, %119 : vector<32x128xf32>
    %121 = arith.mulf %114, %120 : vector<32x128xf32>
    %122 = arith.addf %119, %121 : vector<32x128xf32>
    %c0_51 = arith.constant 0 : index
    %c0_52 = arith.constant 0 : index
    %123 = vector.load %arg14[%c0_51, %c0_52] : memref<32x128xf32, #tpu.memory_space<vmem>>, vector<32x128xf32>
    tpu.vector_store %arg14[%c0_51, %c0_52], %122 {strides = array<i32>} : memref<32x128xf32, #tpu.memory_space<vmem>>, vector<32x128xf32>,
    %c0_53 = arith.constant 0 : index
    %c0_54 = arith.constant 0 : index
    %124 = vector.load %arg14[%c0_53, %c0_54] : memref<32x128xf32, #tpu.memory_space<vmem>>, vector<32x128xf32>
    %125 = arith.mulf %124, %124 : vector<32x128xf32>
    %cst_55 = arith.constant dense<0.000000e+00> : vector<32xf32>
    %126 = vector.multi_reduction <add>, %125, %cst_55 [1] : vector<32x128xf32> to vector<32xf32>
    %127 = vector.shape_cast %126 : vector<32xf32> to vector<32x1xf32>
    %cst_56 = arith.constant 1.000000e-24 : f32
    %128 = vector.broadcast %cst_56 : f32 to vector<32x1xf32>
    %129 = arith.maximumf %127, %128 : vector<32x1xf32>
    %130 = math.rsqrt %129 : vector<32x1xf32>
    %131 = vector.broadcast %130 : vector<32x1xf32> to vector<32x128xf32>
    %132 = arith.mulf %124, %131 : vector<32x128xf32>
    %133 = vector.shape_cast %132 : vector<32x128xf32> to vector<1x32x128xf32>
    %c0_57 = arith.constant 0 : index
    %c0_58 = arith.constant 0 : index
    %c0_59 = arith.constant 0 : index
    %134 = vector.load %arg13[%c0_57, %c0_58, %c0_59] : memref<1x32x128xf32, #tpu.memory_space<vmem>>, vector<1x32x128xf32>
    tpu.vector_store %arg13[%c0_57, %c0_58, %c0_59], %133 {strides = array<i32>} : memref<1x32x128xf32, #tpu.memory_space<vmem>>, vector<1x32x128xf32>,
    return
  }
  func.func @transform_0(%arg0: i32) -> (i32, i32, i32) {
    %c0_i32 = arith.constant 0 : i32
    %c0_i32_0 = arith.constant 0 : i32
    %c0_i32_1 = arith.constant 0 : i32
    return %arg0, %c0_i32, %c0_i32_0 : i32, i32, i32
  }
  func.func @transform_1(%arg0: i32) -> (i32, i32, i32) {
    %c0_i32 = arith.constant 0 : i32
    %c0_i32_0 = arith.constant 0 : i32
    %c0_i32_1 = arith.constant 0 : i32
    return %arg0, %c0_i32, %c0_i32_0 : i32, i32, i32
  }
  func.func @transform_2(%arg0: i32) -> (i32, i32, i32) {
    %c0_i32 = arith.constant 0 : i32
    %c0_i32_0 = arith.constant 0 : i32
    %c0_i32_1 = arith.constant 0 : i32
    return %arg0, %c0_i32, %c0_i32_0 : i32, i32, i32
  }
  func.func @transform_3(%arg0: i32) -> (i32, i32) {
    %c0_i32 = arith.constant 0 : i32
    %c0_i32_0 = arith.constant 0 : i32
    %c0_i32_1 = arith.constant 0 : i32
    return %c0_i32, %c0_i32_0 : i32, i32
  }
  func.func @transform_4(%arg0: i32) -> (i32, i32) {
    %c0_i32 = arith.constant 0 : i32
    %c0_i32_0 = arith.constant 0 : i32
    %c0_i32_1 = arith.constant 0 : i32
    return %c0_i32, %c0_i32_0 : i32, i32
  }
  func.func @transform_5(%arg0: i32) -> (i32, i32) {
    %c0_i32 = arith.constant 0 : i32
    %c0_i32_0 = arith.constant 0 : i32
    %c0_i32_1 = arith.constant 0 : i32
    return %c0_i32, %c0_i32_0 : i32, i32
  }
  func.func @transform_6(%arg0: i32) -> (i32, i32) {
    %c0_i32 = arith.constant 0 : i32
    %c0_i32_0 = arith.constant 0 : i32
    %c0_i32_1 = arith.constant 0 : i32
    return %c0_i32, %c0_i32_0 : i32, i32
  }
  func.func @transform_7(%arg0: i32) -> (i32, i32) {
    %c0_i32 = arith.constant 0 : i32
    %c0_i32_0 = arith.constant 0 : i32
    %c0_i32_1 = arith.constant 0 : i32
    return %c0_i32, %c0_i32_0 : i32, i32
  }
  func.func @transform_8(%arg0: i32) -> (i32, i32) {
    %c0_i32 = arith.constant 0 : i32
    %c0_i32_0 = arith.constant 0 : i32
    %c0_i32_1 = arith.constant 0 : i32
    return %c0_i32, %c0_i32_0 : i32, i32
  }
  func.func @transform_9(%arg0: i32) -> (i32, i32) {
    %c0_i32 = arith.constant 0 : i32
    %c0_i32_0 = arith.constant 0 : i32
    %c0_i32_1 = arith.constant 0 : i32
    return %c0_i32, %c0_i32_0 : i32, i32
  }
  func.func @transform_10(%arg0: i32) -> (i32, i32) {
    %c0_i32 = arith.constant 0 : i32
    %c0_i32_0 = arith.constant 0 : i32
    %c0_i32_1 = arith.constant 0 : i32
    return %c0_i32, %c0_i32_0 : i32, i32
  }
  func.func @transform_11(%arg0: i32) -> (i32, i32) {
    %c0_i32 = arith.constant 0 : i32
    %c0_i32_0 = arith.constant 0 : i32
    %c0_i32_1 = arith.constant 0 : i32
    return %c0_i32, %c0_i32_0 : i32, i32
  }
  func.func @transform_12(%arg0: i32) -> (i32, i32, i32) {
    %c0_i32 = arith.constant 0 : i32
    %c0_i32_0 = arith.constant 0 : i32
    %c0_i32_1 = arith.constant 0 : i32
    return %arg0, %c0_i32, %c0_i32_0 : i32, i32, i32
  }
}

</mosaic_0001>

<llo_original>
// kernel: tpu_custom_call.1
$region0: #{tpu_custom_call.1}
  #allocation0 [shape = 'u32[]', space=smem, size = 0x4, offset = 0x4, fixed_abs, tag = 'smem constant byte address 0x4 - core index']
  #allocation1 [shape = 'u32[72,128]{1,0:T(1,128)}', space=vmem, size = 0x9000, scoped, tag = 'internal scratch']
  #allocation2 [shape = 'f32[32,128]{1,0:T(8,128)}', space=vmem, size = 0x4000, scoped, tag = 'scratch operand']
  %s0 = inlined_call_operand.hbm [shape: bf16[2,32,32], index: 0, kind: input, shape index: {}]
  %s1 = inlined_call_operand.hbm [shape: bf16[2,32,32], index: 1, kind: input, shape index: {}]
  %s2 = inlined_call_operand.hbm [shape: f32[2,32,128], index: 2, kind: input, shape index: {}]
  %s3 = inlined_call_operand.hbm [shape: bf16[128,256], index: 3, kind: input, shape index: {}]
  %s4 = inlined_call_operand.hbm [shape: f32[1,256], index: 4, kind: input, shape index: {}]
  %s5 = inlined_call_operand.hbm [shape: f32[1,128], index: 5, kind: input, shape index: {}]
  %s6 = inlined_call_operand.hbm [shape: f32[1,128], index: 6, kind: input, shape index: {}]
  %s7 = inlined_call_operand.hbm [shape: bf16[128,384], index: 7, kind: input, shape index: {}]
  %s8 = inlined_call_operand.hbm [shape: bf16[128,384], index: 8, kind: input, shape index: {}]
  %s9 = inlined_call_operand.hbm [shape: bf16[128,384], index: 9, kind: input, shape index: {}]
  %s10 = inlined_call_operand.vmem [shape: f32[1,384], index: 10, kind: input, shape index: {}]
  %s11 = inlined_call_operand.vmem [shape: f32[1,384], index: 11, kind: input, shape index: {}]
  %s12 = inlined_call_operand.hbm [shape: f32[2,32,128], index: 12, kind: output, shape index: {}]
  %s13 = sld [smem:[#allocation0]]
  $region121: #{tpu_custom_call.1} parent=0
    _
  %s15 = ssub.s32 1, %s13
  %s16 = scalar_select 0, %s15, %s13
  $region1: #{tpu_custom_call.1} parent=0
    #allocation3 [shape = 'u8[16384]{0}', space=vmem, size = 0x4000, scoped, tag = 'input window, operand 0']
    #allocation4 [shape = 's32[2]{0}', space=sflag, size = 0x8, scoped, tag = 'scoped memory for tpu_custom_call.1']
    #allocation5 [shape = 's32[2]{0}', space=sflag, size = 0x8, scoped, tag = 'scoped memory for tpu_custom_call.1']
    #allocation6 [shape = 'u8[16384]{0}', space=vmem, size = 0x4000, scoped, tag = 'input window, operand 1']
    #allocation7 [shape = 's32[2]{0}', space=sflag, size = 0x8, scoped, tag = 'scoped memory for tpu_custom_call.1']
    #allocation8 [shape = 'u8[32768]{0}', space=vmem, size = 0x8000, scoped, tag = 'input window, operand 2']
    #allocation9 [shape = 'u8[65536]{0}', space=vmem, size = 0x10000, scoped, tag = 'input window, operand 3, single buffered']
    #allocation10 [shape = 's32[1]{0}', space=sflag, size = 0x4, scoped, tag = 'scoped memory for tpu_custom_call.1']
    #allocation11 [shape = 'u8[1024]{0}', space=vmem, size = 0x400, scoped, tag = 'input window, operand 4, single buffered']
    #allocation12 [shape = 'u8[512]{0}', space=vmem, size = 0x400, scoped, tag = 'input window, operand 5, single buffered']
    #allocation13 [shape = 's32[1]{0}', space=sflag, size = 0x4, scoped, tag = 'scoped memory for tpu_custom_call.1']
    #allocation14 [shape = 'u8[512]{0}', space=vmem, size = 0x400, scoped, tag = 'input window, operand 6, single buffered']
    #allocation15 [shape = 'u8[98304]{0}', space=vmem, size = 0x18000, scoped, tag = 'input window, operand 7, single buffered']
    #allocation16 [shape = 's32[1]{0}', space=sflag, size = 0x4, scoped, tag = 'scoped memory for tpu_custom_call.1']
    #allocation17 [shape = 'u8[98304]{0}', space=vmem, size = 0x18000, scoped, tag = 'input window, operand 8, single buffered']
    #allocation18 [shape = 'u8[98304]{0}', space=vmem, size = 0x18000, scoped, tag = 'input window, operand 9, single buffered']
    #allocation19 [shape = 's32[1]{0}', space=sflag, size = 0x4, scoped, tag = 'scoped memory for tpu_custom_call.1']
    #allocation20 [shape = 'u8[32768]{0}', space=vmem, size = 0x8000, scoped, tag = 'output window, operand 0']
    %17 = vsyncpa [#allocation4], 0
    %s18 = scalar_lea.sflag [#allocation4], 1
    %19 = vsyncpa %s18, 0
    %20 = vsyncpa [#allocation7], 0
    %s21 = scalar_lea.sflag [#allocation7], 1
    %22 = vsyncpa %s21, 0
    %23 = vsyncpa [#allocation10], 0
    %24 = vsyncpa [#allocation13], 0
    %25 = vsyncpa [#allocation16], 0
    %26 = vsyncpa [#allocation19], 0
    %27 = vsyncpa [#allocation5], 0
    %s28 = scalar_lea.sflag [#allocation5], 1
    %29 = vsyncpa %s28, 0
    loop: start=0, step=1, limit=4
    $region2: #{tpu_custom_call.1} parent=1 // loop_pre_header
      _
    $region3: #{tpu_custom_call.1} parent=1 // loop_header
      %s31 = sphi 0, %s35
      %p32 = scmp.ge.s32.totalorder %s31, 4
      %s41 = sphi 0, %s43
      %s44 = sphi 0, %s41
      %s45 = sphi 0, %s44
      %s61 = sphi 0, %s45
      %s67 = sphi 0, %s69
      %s70 = sphi 0, %s67
      %s71 = sphi 0, %s70
      %s87 = sphi 0, %s71
      %s93 = sphi 0, %s95
      %s96 = sphi 0, %s93
      %s97 = sphi 0, %s96
      %s113 = sphi 0, %s97
      %s117 = sphi 0, %s117
      %s119 = sphi 0, %s117
      %s120 = sphi 0, %s119
      %s134 = sphi 0, %s120
      %s138 = sphi 0, %s138
      %s140 = sphi 0, %s138
      %s141 = sphi 0, %s140
      %s155 = sphi 0, %s141
      %s159 = sphi 0, %s159
      %s161 = sphi 0, %s159
      %s162 = sphi 0, %s161
      %s176 = sphi 0, %s162
      %s180 = sphi 0, %s180
      %s182 = sphi 0, %s180
      %s183 = sphi 0, %s182
      %s197 = sphi 0, %s183
      %s201 = sphi 0, %s201
      %s203 = sphi 0, %s201
      %s204 = sphi 0, %s203
      %s218 = sphi 0, %s204
      %s222 = sphi 0, %s222
      %s224 = sphi 0, %s222
      %s225 = sphi 0, %s224
      %s239 = sphi 0, %s225
      %s243 = sphi 0, %s243
      %s245 = sphi 0, %s243
      %s246 = sphi 0, %s245
      %s260 = sphi 0, %s246
      %s264 = sphi 0, %s264
      %s266 = sphi 0, %s264
      %s267 = sphi 0, %s266
      %s281 = sphi 0, %s267
      %s285 = sphi 0, %s285
      %s287 = sphi 0, %s285
      %s288 = sphi 0, %s287
      %s302 = sphi 0, %s288
      %s308 = sphi 0, %s310
      %s311 = sphi 0, %s308
      %s312 = sphi 0, %s311
      %s328 = sphi 0, %s312
    $region4: #{tpu_custom_call.1} parent=1 // loop_header_branch
      %34 = sbr.rel (%p32) target = $region8
    $region5: #{tpu_custom_call.1} parent=1 // loop_body
      %s36 = ssub.s32 %s31, 1
      %s37 = ssub.s32 %s31, 2
      %s38 = sadd.s32 %s31, 1
      %s39 = ssub.s32 %s31, %s38
      %p40 = scmp.eq.s32.totalorder %s39, 0
      %s42 = sadd.s32 %s41, 1
      %s43 = scalar_select %p40, %s41, %s42
      %p46 = pneg %p40
      %p47 = scmp.eq.s32.totalorder %s31, 1
      %p48 = por %p46, %p47
      %p49 = scmp.ne.s32.totalorder %s41, %s44
      %p50 = scmp.eq.s32.totalorder %s31, 0
      %p51 = por %p49, %p50
      %p52 = scmp.ne.s32.totalorder %s41, %s44
      %p53 = scmp.eq.s32.totalorder %s36, 1
      %p54 = por %p52, %p53
      %p55 = scmp.ne.s32.totalorder %s44, %s45
      %p56 = scmp.eq.s32.totalorder %s36, 0
      %p57 = por %p55, %p56
      %p58 = scmp.ne.s32.totalorder %s44, %s45
      %p59 = scmp.eq.s32.totalorder %s37, 1
      %p60 = por %p58, %p59
      %p62 = scmp.ne.s32.totalorder %s45, %s61
      %p63 = scmp.eq.s32.totalorder %s37, 0
      %p64 = por %p62, %p63
      %s65 = ssub.s32 %s31, %s38
      %p66 = scmp.eq.s32.totalorder %s65, 0
      %s68 = sadd.s32 %s67, 1
      %s69 = scalar_select %p66, %s67, %s68
      %p72 = pneg %p66
      %p73 = scmp.eq.s32.totalorder %s31, 1
      %p74 = por %p72, %p73
      %p75 = scmp.ne.s32.totalorder %s67, %s70
      %p76 = scmp.eq.s32.totalorder %s31, 0
      %p77 = por %p75, %p76
      %p78 = scmp.ne.s32.totalorder %s67, %s70
      %p79 = scmp.eq.s32.totalorder %s36, 1
      %p80 = por %p78, %p79
      %p81 = scmp.ne.s32.totalorder %s70, %s71
      %p82 = scmp.eq.s32.totalorder %s36, 0
      %p83 = por %p81, %p82
      %p84 = scmp.ne.s32.totalorder %s70, %s71
      %p85 = scmp.eq.s32.totalorder %s37, 1
      %p86 = por %p84, %p85
      %p88 = scmp.ne.s32.totalorder %s71, %s87
      %p89 = scmp.eq.s32.totalorder %s37, 0
      %p90 = por %p88, %p89
      %s91 = ssub.s32 %s31, %s38
      %p92 = scmp.eq.s32.totalorder %s91, 0
      %s94 = sadd.s32 %s93, 1
      %s95 = scalar_select %p92, %s93, %s94
      %p98 = pneg %p92
      %p99 = scmp.eq.s32.totalorder %s31, 1
      %p100 = por %p98, %p99
      %p101 = scmp.ne.s32.totalorder %s93, %s96
      %p102 = scmp.eq.s32.totalorder %s31, 0
      %p103 = por %p101, %p102
      %p104 = scmp.ne.s32.totalorder %s93, %s96
      %p105 = scmp.eq.s32.totalorder %s36, 1
      %p106 = por %p104, %p105
      %p107 = scmp.ne.s32.totalorder %s96, %s97
      %p108 = scmp.eq.s32.totalorder %s36, 0
      %p109 = por %p107, %p108
      %p110 = scmp.ne.s32.totalorder %s96, %s97
      %p111 = scmp.eq.s32.totalorder %s37, 1
      %p112 = por %p110, %p111
      %p114 = scmp.ne.s32.totalorder %s97, %s113
      %p115 = scmp.eq.s32.totalorder %s37, 0
      %p116 = por %p114, %p115
      %s118 = sadd.s32 %s117, 1
      %p121 = scmp.eq.s32.totalorder %s31, 1
      %p122 = scmp.ne.s32.totalorder %s117, %s119
      %p123 = scmp.eq.s32.totalorder %s31, 0
      %p124 = por %p122, %p123
      %p125 = scmp.ne.s32.totalorder %s117, %s119
      %p126 = scmp.eq.s32.totalorder %s36, 1
      %p127 = por %p125, %p126
      %p128 = scmp.ne.s32.totalorder %s119, %s120
      %p129 = scmp.eq.s32.totalorder %s36, 0
      %p130 = por %p128, %p129
      %p131 = scmp.ne.s32.totalorder %s119, %s120
      %p132 = scmp.eq.s32.totalorder %s37, 1
      %p133 = por %p131, %p132
      %p135 = scmp.ne.s32.totalorder %s120, %s134
      %p136 = scmp.eq.s32.totalorder %s37, 0
      %p137 = por %p135, %p136
      %s139 = sadd.s32 %s138, 1
      %p142 = scmp.eq.s32.totalorder %s31, 1
      %p143 = scmp.ne.s32.totalorder %s138, %s140
      %p144 = scmp.eq.s32.totalorder %s31, 0
      %p145 = por %p143, %p144
      %p146 = scmp.ne.s32.totalorder %s138, %s140
      %p147 = scmp.eq.s32.totalorder %s36, 1
      %p148 = por %p146, %p147
      %p149 = scmp.ne.s32.totalorder %s140, %s141
      %p150 = scmp.eq.s32.totalorder %s36, 0
      %p151 = por %p149, %p150
      %p152 = scmp.ne.s32.totalorder %s140, %s141
      %p153 = scmp.eq.s32.totalorder %s37, 1
      %p154 = por %p152, %p153
      %p156 = scmp.ne.s32.totalorder %s141, %s155
      %p157 = scmp.eq.s32.totalorder %s37, 0
      %p158 = por %p156, %p157
      %s160 = sadd.s32 %s159, 1
      %p163 = scmp.eq.s32.totalorder %s31, 1
      %p164 = scmp.ne.s32.totalorder %s159, %s161
      %p165 = scmp.eq.s32.totalorder %s31, 0
      %p166 = por %p164, %p165
      %p167 = scmp.ne.s32.totalorder %s159, %s161
      %p168 = scmp.eq.s32.totalorder %s36, 1
      %p169 = por %p167, %p168
      %p170 = scmp.ne.s32.totalorder %s161, %s162
      %p171 = scmp.eq.s32.totalorder %s36, 0
      %p172 = por %p170, %p171
      %p173 = scmp.ne.s32.totalorder %s161, %s162
      %p174 = scmp.eq.s32.totalorder %s37, 1
      %p175 = por %p173, %p174
      %p177 = scmp.ne.s32.totalorder %s162, %s176
      %p178 = scmp.eq.s32.totalorder %s37, 0
      %p179 = por %p177, %p178
      %s181 = sadd.s32 %s180, 1
      %p184 = scmp.eq.s32.totalorder %s31, 1
      %p185 = scmp.ne.s32.totalorder %s180, %s182
      %p186 = scmp.eq.s32.totalorder %s31, 0
      %p187 = por %p185, %p186
      %p188 = scmp.ne.s32.totalorder %s180, %s182
      %p189 = scmp.eq.s32.totalorder %s36, 1
      %p190 = por %p188, %p189
      %p191 = scmp.ne.s32.totalorder %s182, %s183
      %p192 = scmp.eq.s32.totalorder %s36, 0
      %p193 = por %p191, %p192
      %p194 = scmp.ne.s32.totalorder %s182, %s183
      %p195 = scmp.eq.s32.totalorder %s37, 1
      %p196 = por %p194, %p195
      %p198 = scmp.ne.s32.totalorder %s183, %s197
      %p199 = scmp.eq.s32.totalorder %s37, 0
      %p200 = por %p198, %p199
      %s202 = sadd.s32 %s201, 1
      %p205 = scmp.eq.s32.totalorder %s31, 1
      %p206 = scmp.ne.s32.totalorder %s201, %s203
      %p207 = scmp.eq.s32.totalorder %s31, 0
      %p208 = por %p206, %p207
      %p209 = scmp.ne.s32.totalorder %s201, %s203
      %p210 = scmp.eq.s32.totalorder %s36, 1
      %p211 = por %p209, %p210
      %p212 = scmp.ne.s32.totalorder %s203, %s204
      %p213 = scmp.eq.s32.totalorder %s36, 0
      %p214 = por %p212, %p213
      %p215 = scmp.ne.s32.totalorder %s203, %s204
      %p216 = scmp.eq.s32.totalorder %s37, 1
      %p217 = por %p215, %p216
      %p219 = scmp.ne.s32.totalorder %s204, %s218
      %p220 = scmp.eq.s32.totalorder %s37, 0
      %p221 = por %p219, %p220
      %s223 = sadd.s32 %s222, 1
      %p226 = scmp.eq.s32.totalorder %s31, 1
      %p227 = scmp.ne.s32.totalorder %s222, %s224
      %p228 = scmp.eq.s32.totalorder %s31, 0
      %p229 = por %p227, %p228
      %p230 = scmp.ne.s32.totalorder %s222, %s224
      %p231 = scmp.eq.s32.totalorder %s36, 1
      %p232 = por %p230, %p231
      %p233 = scmp.ne.s32.totalorder %s224, %s225
      %p234 = scmp.eq.s32.totalorder %s36, 0
      %p235 = por %p233, %p234
      %p236 = scmp.ne.s32.totalorder %s224, %s225
      %p237 = scmp.eq.s32.totalorder %s37, 1
      %p238 = por %p236, %p237
      %p240 = scmp.ne.s32.totalorder %s225, %s239
      %p241 = scmp.eq.s32.totalorder %s37, 0
      %p242 = por %p240, %p241
      %s244 = sadd.s32 %s243, 1
      %p247 = scmp.eq.s32.totalorder %s31, 1
      %p248 = scmp.ne.s32.totalorder %s243, %s245
      %p249 = scmp.eq.s32.totalorder %s31, 0
      %p250 = por %p248, %p249
      %p251 = scmp.ne.s32.totalorder %s243, %s245
      %p252 = scmp.eq.s32.totalorder %s36, 1
      %p253 = por %p251, %p252
      %p254 = scmp.ne.s32.totalorder %s245, %s246
      %p255 = scmp.eq.s32.totalorder %s36, 0
      %p256 = por %p254, %p255
      %p257 = scmp.ne.s32.totalorder %s245, %s246
      %p258 = scmp.eq.s32.totalorder %s37, 1
      %p259 = por %p257, %p258
      %p261 = scmp.ne.s32.totalorder %s246, %s260
      %p262 = scmp.eq.s32.totalorder %s37, 0
      %p263 = por %p261, %p262
      %s265 = sadd.s32 %s264, 1
      %p268 = scmp.eq.s32.totalorder %s31, 1
      %p269 = scmp.ne.s32.totalorder %s264, %s266
      %p270 = scmp.eq.s32.totalorder %s31, 0
      %p271 = por %p269, %p270
      %p272 = scmp.ne.s32.totalorder %s264, %s266
      %p273 = scmp.eq.s32.totalorder %s36, 1
      %p274 = por %p272, %p273
      %p275 = scmp.ne.s32.totalorder %s266, %s267
      %p276 = scmp.eq.s32.totalorder %s36, 0
      %p277 = por %p275, %p276
      %p278 = scmp.ne.s32.totalorder %s266, %s267
      %p279 = scmp.eq.s32.totalorder %s37, 1
      %p280 = por %p278, %p279
      %p282 = scmp.ne.s32.totalorder %s267, %s281
      %p283 = scmp.eq.s32.totalorder %s37, 0
      %p284 = por %p282, %p283
      %s286 = sadd.s32 %s285, 1
      %p289 = scmp.eq.s32.totalorder %s31, 1
      %p290 = scmp.ne.s32.totalorder %s285, %s287
      %p291 = scmp.eq.s32.totalorder %s31, 0
      %p292 = por %p290, %p291
      %p293 = scmp.ne.s32.totalorder %s285, %s287
      %p294 = scmp.eq.s32.totalorder %s36, 1
      %p295 = por %p293, %p294
      %p296 = scmp.ne.s32.totalorder %s287, %s288
      %p297 = scmp.eq.s32.totalorder %s36, 0
      %p298 = por %p296, %p297
      %p299 = scmp.ne.s32.totalorder %s287, %s288
      %p300 = scmp.eq.s32.totalorder %s37, 1
      %p301 = por %p299, %p300
      %p303 = scmp.ne.s32.totalorder %s288, %s302
      %p304 = scmp.eq.s32.totalorder %s37, 0
      %p305 = por %p303, %p304
      %s306 = ssub.s32 %s31, %s38
      %p307 = scmp.eq.s32.totalorder %s306, 0
      %s309 = sadd.s32 %s308, 1
      %s310 = scalar_select %p307, %s308, %s309
      %p313 = pneg %p307
      %p314 = scmp.eq.s32.totalorder %s31, 1
      %p315 = por %p313, %p314
      %p316 = scmp.ne.s32.totalorder %s308, %s311
      %p317 = scmp.eq.s32.totalorder %s31, 0
      %p318 = por %p316, %p317
      %p319 = scmp.ne.s32.totalorder %s308, %s311
      %p320 = scmp.eq.s32.totalorder %s36, 1
      %p321 = por %p319, %p320
      %p322 = scmp.ne.s32.totalorder %s311, %s312
      %p323 = scmp.eq.s32.totalorder %s36, 0
      %p324 = por %p322, %p323
      %p325 = scmp.ne.s32.totalorder %s311, %s312
      %p326 = scmp.eq.s32.totalorder %s37, 1
      %p327 = por %p325, %p326
      %p329 = scmp.ne.s32.totalorder %s312, %s328
      %p330 = scmp.eq.s32.totalorder %s37, 0
      %p331 = por %p329, %p330
      %p332 = scmp.le.s32.totalorder 1, %s31
      %p333 = scmp.lt.s32.totalorder %s31, 3
      %p334 = pnand %p332, %p333
      %p335 = pneg %p334
      // Predicated region
      $region9: #{tpu_custom_call.1} parent=5 // pred_check
        _
      $region10: #{tpu_custom_call.1} parent=5 // pred_check_branch
        %337 = sbr.rel (%p334) target = $region12
      $region11: #{tpu_custom_call.1} parent=5 // pred_region
        %s338 = ssub.s32 %s31, 1
        // Predicated region
        $region13: #{tpu_custom_call.1} parent=11 // pred_check
          %p339 = pneg %p130
        $region14: #{tpu_custom_call.1} parent=11 // pred_check_branch
          %341 = sbr.rel (%p339) target = $region16
        $region15: #{tpu_custom_call.1} parent=11 // pred_region
          %343 = vsyncadd [#allocation10], 0
          %s344 = sshll.u32 %s3, 4
          %s345 = int_to_ptr.hbm [resolvable:$true] %s344
          %s346 = sshll.u32 [#allocation9], 4
          %s347 = int_to_ptr.vmem [resolvable:$true] %s346
          %352 = dma.hbm_to_vmem [thread:$0]  %s345, 2048, %s347, [#allocation10], 128, 128, 8
        $region16: #{tpu_custom_call.1} parent=11 // pred_fallthru
          _
        // Predicated region
        $region17: #{tpu_custom_call.1} parent=11 // pred_check
          %p353 = pneg %p151
        $region18: #{tpu_custom_call.1} parent=11 // pred_check_branch
          %355 = sbr.rel (%p353) target = $region20
        $region19: #{tpu_custom_call.1} parent=11 // pred_region
          %357 = vsyncadd [#allocation10], 0
          %s359 = sshll.u32 %s4, 4
          %s360 = int_to_ptr.hbm [resolvable:$true] %s359
          %s361 = sshll.u32 [#allocation11], 4
          %s362 = int_to_ptr.vmem [resolvable:$true] %s361
          %364 = dma.hbm_to_vmem [thread:$0]  %s360, 32, %s362, [#allocation10]
        $region20: #{tpu_custom_call.1} parent=11 // pred_fallthru
          _
        // Predicated region
        $region21: #{tpu_custom_call.1} parent=11 // pred_check
          %p365 = pneg %p172
        $region22: #{tpu_custom_call.1} parent=11 // pred_check_branch
          %367 = sbr.rel (%p365) target = $region24
        $region23: #{tpu_custom_call.1} parent=11 // pred_region
          %369 = vsyncadd [#allocation13], 0
          %s371 = sshll.u32 %s5, 4
          %s372 = int_to_ptr.hbm [resolvable:$true] %s371
          %s373 = sshll.u32 [#allocation12], 4
          %s374 = int_to_ptr.vmem [resolvable:$true] %s373
          %376 = dma.hbm_to_vmem [thread:$0]  %s372, 16, %s374, [#allocation13]
        $region24: #{tpu_custom_call.1} parent=11 // pred_fallthru
          _
        // Predicated region
        $region25: #{tpu_custom_call.1} parent=11 // pred_check
          %p377 = pneg %p193
        $region26: #{tpu_custom_call.1} parent=11 // pred_check_branch
          %379 = sbr.rel (%p377) target = $region28
        $region27: #{tpu_custom_call.1} parent=11 // pred_region
          %381 = vsyncadd [#allocation13], 0
          %s383 = sshll.u32 %s6, 4
          %s384 = int_to_ptr.hbm [resolvable:$true] %s383
          %s385 = sshll.u32 [#allocation14], 4
          %s386 = int_to_ptr.vmem [resolvable:$true] %s385
          %388 = dma.hbm_to_vmem [thread:$0]  %s384, 16, %s386, [#allocation13]
        $region28: #{tpu_custom_call.1} parent=11 // pred_fallthru
          _
        // Predicated region
        $region29: #{tpu_custom_call.1} parent=11 // pred_check
          %p389 = pneg %p214
        $region30: #{tpu_custom_call.1} parent=11 // pred_check_branch
          %391 = sbr.rel (%p389) target = $region32
        $region31: #{tpu_custom_call.1} parent=11 // pred_region
          %393 = vsyncadd [#allocation16], 0
          %s394 = sshll.u32 %s7, 4
          %s395 = int_to_ptr.hbm [resolvable:$true] %s394
          %s396 = sshll.u32 [#allocation15], 4
          %s397 = int_to_ptr.vmem [resolvable:$true] %s396
          %402 = dma.hbm_to_vmem [thread:$0]  %s395, 3072, %s397, [#allocation16], 192, 192, 12
        $region32: #{tpu_custom_call.1} parent=11 // pred_fallthru
          _
        // Predicated region
        $region33: #{tpu_custom_call.1} parent=11 // pred_check
          %p403 = pneg %p235
        $region34: #{tpu_custom_call.1} parent=11 // pred_check_branch
          %405 = sbr.rel (%p403) target = $region36
        $region35: #{tpu_custom_call.1} parent=11 // pred_region
          %407 = vsyncadd [#allocation16], 0
          %s408 = sshll.u32 %s8, 4
          %s409 = int_to_ptr.hbm [resolvable:$true] %s408
          %s410 = sshll.u32 [#allocation17], 4
          %s411 = int_to_ptr.vmem [resolvable:$true] %s410
          %416 = dma.hbm_to_vmem [thread:$0]  %s409, 3072, %s411, [#allocation16], 192, 192, 12
        $region36: #{tpu_custom_call.1} parent=11 // pred_fallthru
          _
        // Predicated region
        $region37: #{tpu_custom_call.1} parent=11 // pred_check
          %p417 = pneg %p256
        $region38: #{tpu_custom_call.1} parent=11 // pred_check_branch
          %419 = sbr.rel (%p417) target = $region40
        $region39: #{tpu_custom_call.1} parent=11 // pred_region
          %421 = vsyncadd [#allocation19], 0
          %s422 = sshll.u32 %s9, 4
          %s423 = int_to_ptr.hbm [resolvable:$true] %s422
          %s424 = sshll.u32 [#allocation18], 4
          %s425 = int_to_ptr.vmem [resolvable:$true] %s424
          %430 = dma.hbm_to_vmem [thread:$0]  %s423, 3072, %s425, [#allocation19], 192, 192, 12
        $region40: #{tpu_custom_call.1} parent=11 // pred_fallthru
          _
        // Predicated region
        $region41: #{tpu_custom_call.1} parent=11 // pred_check
          %p431 = pneg %p277
        $region42: #{tpu_custom_call.1} parent=11 // pred_check_branch
          %433 = sbr.rel (%p431) target = $region44
        $region43: #{tpu_custom_call.1} parent=11 // pred_region
          _
        $region44: #{tpu_custom_call.1} parent=11 // pred_fallthru
          _
        // Predicated region
        $region45: #{tpu_custom_call.1} parent=11 // pred_check
          %p434 = pneg %p298
        $region46: #{tpu_custom_call.1} parent=11 // pred_check_branch
          %436 = sbr.rel (%p434) target = $region48
        $region47: #{tpu_custom_call.1} parent=11 // pred_region
          _
        $region48: #{tpu_custom_call.1} parent=11 // pred_fallthru
          _
      $region12: #{tpu_custom_call.1} parent=5 // pred_fallthru
        _
      %p437 = scmp.lt.s32.totalorder %s31, 2
      // Predicated region
      $region49: #{tpu_custom_call.1} parent=5 // pred_check
        %p438 = pneg %p437
      $region50: #{tpu_custom_call.1} parent=5 // pred_check_branch
        %440 = sbr.rel (%p438) target = $region52
      $region51: #{tpu_custom_call.1} parent=5 // pred_region
        // Predicated region
        $region53: #{tpu_custom_call.1} parent=51 // pred_check
          %p441 = pneg %p51
        $region54: #{tpu_custom_call.1} parent=51 // pred_check_branch
          %443 = sbr.rel (%p441) target = $region56
        $region55: #{tpu_custom_call.1} parent=51 // pred_region
          %s444 = sand.u32 %s41, 1
          %s445 = scalar_lea.sflag [#allocation4], %s444
          %s446 = sand.u32 %s41, 1
          %s447 = smul.addr %s446, 16
          %s448 = scalar_lea.vmem [#allocation3], %s447
          %450 = vsyncadd %s445, 0
          %s451 = smul.addr %s31, 4
          %s452 = smul.addr %s451, 4
          %s453 = scalar_lea.hbm %s0, %s452
          %s454 = sshll.u32 %s453, 4
          %s455 = int_to_ptr.hbm [resolvable:$true] %s454
          %s456 = sshll.u32 %s448, 4
          %s457 = int_to_ptr.vmem [resolvable:$true] %s456
          %462 = dma.hbm_to_vmem [thread:$0]  %s455, 256, %s457, %s445, 64, 64, 4
        $region56: #{tpu_custom_call.1} parent=51 // pred_fallthru
          _
        // Predicated region
        $region57: #{tpu_custom_call.1} parent=51 // pred_check
          %p463 = pneg %p77
        $region58: #{tpu_custom_call.1} parent=51 // pred_check_branch
          %465 = sbr.rel (%p463) target = $region60
        $region59: #{tpu_custom_call.1} parent=51 // pred_region
          %s466 = sand.u32 %s31, 1
          %s467 = scalar_lea.sflag [#allocation7], %s466
          %s468 = sand.u32 %s67, 1
          %s469 = smul.addr %s468, 16
          %s470 = scalar_lea.vmem [#allocation6], %s469
          %472 = vsyncadd %s467, 0
          %s473 = smul.addr %s31, 4
          %s474 = smul.addr %s473, 4
          %s475 = scalar_lea.hbm %s1, %s474
          %s476 = sshll.u32 %s475, 4
          %s477 = int_to_ptr.hbm [resolvable:$true] %s476
          %s478 = sshll.u32 %s470, 4
          %s479 = int_to_ptr.vmem [resolvable:$true] %s478
          %484 = dma.hbm_to_vmem [thread:$0]  %s477, 256, %s479, %s467, 64, 64, 4
        $region60: #{tpu_custom_call.1} parent=51 // pred_fallthru
          _
        // Predicated region
        $region61: #{tpu_custom_call.1} parent=51 // pred_check
          %p485 = pneg %p103
        $region62: #{tpu_custom_call.1} parent=51 // pred_check_branch
          %487 = sbr.rel (%p485) target = $region64
        $region63: #{tpu_custom_call.1} parent=51 // pred_region
          %s488 = sand.u32 %s31, 1
          %s489 = scalar_lea.sflag [#allocation7], %s488
          %s490 = sand.u32 %s93, 1
          %s491 = smul.addr %s490, 32
          %s492 = scalar_lea.vmem [#allocation8], %s491
          %494 = vsyncadd %s489, 0
          %s495 = smul.addr %s31, 4
          %s496 = smul.addr %s495, 8
          %s497 = scalar_lea.hbm %s2, %s496
          %s498 = sshll.u32 %s497, 4
          %s499 = int_to_ptr.hbm [resolvable:$true] %s498
          %s500 = sshll.u32 %s492, 4
          %s501 = int_to_ptr.vmem [resolvable:$true] %s500
          %506 = dma.hbm_to_vmem [thread:$0]  %s499, 512, %s501, %s489, 128, 128, 8
        $region64: #{tpu_custom_call.1} parent=51 // pred_fallthru
          _
      $region52: #{tpu_custom_call.1} parent=5 // pred_fallthru
        _
      %p507 = scmp.le.s32.totalorder 1, %s31
      %p508 = scmp.lt.s32.totalorder %s31, 3
      %p509 = pnand %p507, %p508
      %p510 = pneg %p509
      // Predicated region
      $region65: #{tpu_custom_call.1} parent=5 // pred_check
        _
      $region66: #{tpu_custom_call.1} parent=5 // pred_check_branch
        %512 = sbr.rel (%p509) target = $region68
      $region67: #{tpu_custom_call.1} parent=5 // pred_region
        %s513 = ssub.s32 %s31, 1
        %s514 = sand.u32 %s44, 1
        %s515 = scalar_lea.sflag [#allocation4], %s514
        %s516 = sand.u32 %s44, 1
        %s517 = smul.addr %s516, 16
        %s518 = scalar_lea.vmem [#allocation3], %s517
        // Predicated region
        $region69: #{tpu_custom_call.1} parent=67 // pred_check
          %p519 = pneg %p57
        $region70: #{tpu_custom_call.1} parent=67 // pred_check_branch
          %521 = sbr.rel (%p519) target = $region72
        $region71: #{tpu_custom_call.1} parent=67 // pred_region
          %523 = dma.done %s515, 256
        $region72: #{tpu_custom_call.1} parent=67 // pred_fallthru
          _
        %s524 = sand.u32 %s36, 1
        %s525 = scalar_lea.sflag [#allocation7], %s524
        %s526 = sand.u32 %s70, 1
        %s527 = smul.addr %s526, 16
        %s528 = scalar_lea.vmem [#allocation6], %s527
        // Predicated region
        $region73: #{tpu_custom_call.1} parent=67 // pred_check
          %p529 = pneg %p83
        $region74: #{tpu_custom_call.1} parent=67 // pred_check_branch
          %531 = sbr.rel (%p529) target = $region76
        $region75: #{tpu_custom_call.1} parent=67 // pred_region
          %533 = dma.done %s525, 256
        $region76: #{tpu_custom_call.1} parent=67 // pred_fallthru
          _
        %s534 = sand.u32 %s36, 1
        %s535 = scalar_lea.sflag [#allocation7], %s534
        %s536 = sand.u32 %s96, 1
        %s537 = smul.addr %s536, 32
        %s538 = scalar_lea.vmem [#allocation8], %s537
        // Predicated region
        $region77: #{tpu_custom_call.1} parent=67 // pred_check
          %p539 = pneg %p109
        $region78: #{tpu_custom_call.1} parent=67 // pred_check_branch
          %541 = sbr.rel (%p539) target = $region80
        $region79: #{tpu_custom_call.1} parent=67 // pred_region
          %543 = dma.done %s535, 512
        $region80: #{tpu_custom_call.1} parent=67 // pred_fallthru
          _
        // Predicated region
        $region81: #{tpu_custom_call.1} parent=67 // pred_check
          %p544 = pneg %p130
        $region82: #{tpu_custom_call.1} parent=67 // pred_check_branch
          %546 = sbr.rel (%p544) target = $region84
        $region83: #{tpu_custom_call.1} parent=67 // pred_region
          %548 = dma.done [#allocation10], 2048
        $region84: #{tpu_custom_call.1} parent=67 // pred_fallthru
          _
        // Predicated region
        $region85: #{tpu_custom_call.1} parent=67 // pred_check
          %p549 = pneg %p151
        $region86: #{tpu_custom_call.1} parent=67 // pred_check_branch
          %551 = sbr.rel (%p549) target = $region88
        $region87: #{tpu_custom_call.1} parent=67 // pred_region
          %553 = dma.done [#allocation10], 32
        $region88: #{tpu_custom_call.1} parent=67 // pred_fallthru
          _
        // Predicated region
        $region89: #{tpu_custom_call.1} parent=67 // pred_check
          %p554 = pneg %p172
        $region90: #{tpu_custom_call.1} parent=67 // pred_check_branch
          %556 = sbr.rel (%p554) target = $region92
        $region91: #{tpu_custom_call.1} parent=67 // pred_region
          %558 = dma.done [#allocation13], 16
        $region92: #{tpu_custom_call.1} parent=67 // pred_fallthru
          _
        // Predicated region
        $region93: #{tpu_custom_call.1} parent=67 // pred_check
          %p559 = pneg %p193
        $region94: #{tpu_custom_call.1} parent=67 // pred_check_branch
          %561 = sbr.rel (%p559) target = $region96
        $region95: #{tpu_custom_call.1} parent=67 // pred_region
          %563 = dma.done [#allocation13], 16
        $region96: #{tpu_custom_call.1} parent=67 // pred_fallthru
          _
        // Predicated region
        $region97: #{tpu_custom_call.1} parent=67 // pred_check
          %p564 = pneg %p214
        $region98: #{tpu_custom_call.1} parent=67 // pred_check_branch
          %566 = sbr.rel (%p564) target = $region100
        $region99: #{tpu_custom_call.1} parent=67 // pred_region
          %568 = dma.done [#allocation16], 3072
        $region100: #{tpu_custom_call.1} parent=67 // pred_fallthru
          _
        // Predicated region
        $region101: #{tpu_custom_call.1} parent=67 // pred_check
          %p569 = pneg %p235
        $region102: #{tpu_custom_call.1} parent=67 // pred_check_branch
          %571 = sbr.rel (%p569) target = $region104
        $region103: #{tpu_custom_call.1} parent=67 // pred_region
          %573 = dma.done [#allocation16], 3072
        $region104: #{tpu_custom_call.1} parent=67 // pred_fallthru
          _
        // Predicated region
        $region105: #{tpu_custom_call.1} parent=67 // pred_check
          %p574 = pneg %p256
        $region106: #{tpu_custom_call.1} parent=67 // pred_check_branch
          %576 = sbr.rel (%p574) target = $region108
        $region107: #{tpu_custom_call.1} parent=67 // pred_region
          %578 = dma.done [#allocation19], 3072
        $region108: #{tpu_custom_call.1} parent=67 // pred_fallthru
          _
        %s579 = sand.u32 %s44, 1
        %s580 = scalar_lea.sflag [#allocation4], %s579
        %s581 = sand.u32 %s44, 1
        %s582 = smul.addr %s581, 16
        %s583 = scalar_lea.vmem [#allocation3], %s582
        %p584 = pneg %p57
        %p585 = pneg %p54
        %s586 = sand.u32 %s36, 1
        %s587 = scalar_lea.sflag [#allocation7], %s586
        %s588 = sand.u32 %s70, 1
        %s589 = smul.addr %s588, 16
        %s590 = scalar_lea.vmem [#allocation6], %s589
        %p591 = pneg %p83
        %p592 = pneg %p80
        %s593 = sand.u32 %s36, 1
        %s594 = scalar_lea.sflag [#allocation7], %s593
        %s595 = sand.u32 %s96, 1
        %s596 = smul.addr %s595, 32
        %s597 = scalar_lea.vmem [#allocation8], %s596
        %p598 = pneg %p109
        %p599 = pneg %p106
        %p600 = pneg %p130
        %p601 = pneg %p127
        %p602 = pneg %p151
        %p603 = pneg %p148
        %p604 = pneg %p172
        %p605 = pneg %p169
        %p606 = pneg %p193
        %p607 = pneg %p190
        %p608 = pneg %p214
        %p609 = pneg %p211
        %p610 = pneg %p235
        %p611 = pneg %p232
        %p612 = pneg %p256
        %p613 = pneg %p253
        %p614 = pneg %p277
        %p615 = pneg %p274
        %p616 = pneg %p298
        %p617 = pneg %p295
        %p618 = pneg %p324
        %p619 = pneg %p321
        %s620 = sand.u32 %s311, 1
        %s621 = scalar_lea.sflag [#allocation5], %s620
        %s622 = sand.u32 %s311, 1
        %s623 = smul.addr %s622, 32
        %s624 = scalar_lea.vmem [#allocation20], %s623
        %v626 = vld [vmem:[%s518] sm:$0xf]
        %v627 = vld [vmem:[%s518 + $0x4] sm:$0xf]
        %v628 = vld [vmem:[%s518 + $0x8] sm:$0xf]
        %v629 = vld [vmem:[%s518 + $0xc] sm:$0xf]
        %v630 = vld [vmem:[%s528] sm:$0xf]
        %v631 = vld [vmem:[%s528 + $0x4] sm:$0xf]
        %v632 = vld [vmem:[%s528 + $0x8] sm:$0xf]
        %v633 = vld [vmem:[%s528 + $0xc] sm:$0xf]
        %v634 = vld [vmem:[#allocation9] sm:$0xff]
        %v635 = vld [vmem:[#allocation9 + $0x8] sm:$0xff]
        %v636 = vld [vmem:[#allocation9 + $0x10] sm:$0xff]
        %v637 = vld [vmem:[#allocation9 + $0x18] sm:$0xff]
        %v638 = vld [vmem:[#allocation9 + $0x20] sm:$0xff]
        %v639 = vld [vmem:[#allocation9 + $0x28] sm:$0xff]
        %v640 = vld [vmem:[#allocation9 + $0x30] sm:$0xff]
        %v641 = vld [vmem:[#allocation9 + $0x38] sm:$0xff]
        %v642 = vld [vmem:[#allocation9 + $0x40] sm:$0xff]
        %v643 = vld [vmem:[#allocation9 + $0x48] sm:$0xff]
        %v644 = vld [vmem:[#allocation9 + $0x50] sm:$0xff]
        %v645 = vld [vmem:[#allocation9 + $0x58] sm:$0xff]
        %v646 = vld [vmem:[#allocation9 + $0x60] sm:$0xff]
        %v647 = vld [vmem:[#allocation9 + $0x68] sm:$0xff]
        %v648 = vld [vmem:[#allocation9 + $0x70] sm:$0xff]
        %v649 = vld [vmem:[#allocation9 + $0x78] sm:$0xff]
        %v650 = vld [vmem:[#allocation15] sm:$0xff]
        %v651 = vld [vmem:[#allocation15 + $0x8] sm:$0xf]
        %v652 = vld [vmem:[#allocation15 + $0xc] sm:$0xff]
        %v653 = vld [vmem:[#allocation15 + $0x14] sm:$0xf]
        %v654 = vld [vmem:[#allocation15 + $0x18] sm:$0xff]
        %v655 = vld [vmem:[#allocation15 + $0x20] sm:$0xf]
        %v656 = vld [vmem:[#allocation15 + $0x24] sm:$0xff]
        %v657 = vld [vmem:[#allocation15 + $0x2c] sm:$0xf]
        %v658 = vld [vmem:[#allocation15 + $0x30] sm:$0xff]
        %v659 = vld [vmem:[#allocation15 + $0x38] sm:$0xf]
        %v660 = vld [vmem:[#allocation15 + $0x3c] sm:$0xff]
        %v661 = vld [vmem:[#allocation15 + $0x44] sm:$0xf]
        %v662 = vld [vmem:[#allocation15 + $0x48] sm:$0xff]
        %v663 = vld [vmem:[#allocation15 + $0x50] sm:$0xf]
        %v664 = vld [vmem:[#allocation15 + $0x54] sm:$0xff]
        %v665 = vld [vmem:[#allocation15 + $0x5c] sm:$0xf]
        %v666 = vld [vmem:[#allocation15 + $0x60] sm:$0xff]
        %v667 = vld [vmem:[#allocation15 + $0x68] sm:$0xf]
        %v668 = vld [vmem:[#allocation15 + $0x6c] sm:$0xff]
        %v669 = vld [vmem:[#allocation15 + $0x74] sm:$0xf]
        %v670 = vld [vmem:[#allocation15 + $0x78] sm:$0xff]
        %v671 = vld [vmem:[#allocation15 + $0x80] sm:$0xf]
        %v672 = vld [vmem:[#allocation15 + $0x84] sm:$0xff]
        %v673 = vld [vmem:[#allocation15 + $0x8c] sm:$0xf]
        %v674 = vld [vmem:[#allocation15 + $0x90] sm:$0xff]
        %v675 = vld [vmem:[#allocation15 + $0x98] sm:$0xf]
        %v676 = vld [vmem:[#allocation15 + $0x9c] sm:$0xff]
        %v677 = vld [vmem:[#allocation15 + $0xa4] sm:$0xf]
        %v678 = vld [vmem:[#allocation15 + $0xa8] sm:$0xff]
        %v679 = vld [vmem:[#allocation15 + $0xb0] sm:$0xf]
        %v680 = vld [vmem:[#allocation15 + $0xb4] sm:$0xff]
        %v681 = vld [vmem:[#allocation15 + $0xbc] sm:$0xf]
        %v682 = vld [vmem:[#allocation17] sm:$0xff]
        %v683 = vld [vmem:[#allocation17 + $0x8] sm:$0xf]
        %v684 = vld [vmem:[#allocation17 + $0xc] sm:$0xff]
        %v685 = vld [vmem:[#allocation17 + $0x14] sm:$0xf]
        %v686 = vld [vmem:[#allocation17 + $0x18] sm:$0xff]
        %v687 = vld [vmem:[#allocation17 + $0x20] sm:$0xf]
        %v688 = vld [vmem:[#allocation17 + $0x24] sm:$0xff]
        %v689 = vld [vmem:[#allocation17 + $0x2c] sm:$0xf]
        %v690 = vld [vmem:[#allocation17 + $0x30] sm:$0xff]
        %v691 = vld [vmem:[#allocation17 + $0x38] sm:$0xf]
        %v692 = vld [vmem:[#allocation17 + $0x3c] sm:$0xff]
        %v693 = vld [vmem:[#allocation17 + $0x44] sm:$0xf]
        %v694 = vld [vmem:[#allocation17 + $0x48] sm:$0xff]
        %v695 = vld [vmem:[#allocation17 + $0x50] sm:$0xf]
        %v696 = vld [vmem:[#allocation17 + $0x54] sm:$0xff]
        %v697 = vld [vmem:[#allocation17 + $0x5c] sm:$0xf]
        %v698 = vld [vmem:[#allocation17 + $0x60] sm:$0xff]
        %v699 = vld [vmem:[#allocation17 + $0x68] sm:$0xf]
        %v700 = vld [vmem:[#allocation17 + $0x6c] sm:$0xff]
        %v701 = vld [vmem:[#allocation17 + $0x74] sm:$0xf]
        %v702 = vld [vmem:[#allocation17 + $0x78] sm:$0xff]
        %v703 = vld [vmem:[#allocation17 + $0x80] sm:$0xf]
        %v704 = vld [vmem:[#allocation17 + $0x84] sm:$0xff]
        %v705 = vld [vmem:[#allocation17 + $0x8c] sm:$0xf]
        %v706 = vld [vmem:[#allocation17 + $0x90] sm:$0xff]
        %v707 = vld [vmem:[#allocation17 + $0x98] sm:$0xf]
        %v708 = vld [vmem:[#allocation17 + $0x9c] sm:$0xff]
        %v709 = vld [vmem:[#allocation17 + $0xa4] sm:$0xf]
        %v710 = vld [vmem:[#allocation17 + $0xa8] sm:$0xff]
        %v711 = vld [vmem:[#allocation17 + $0xb0] sm:$0xf]
        %v712 = vld [vmem:[#allocation17 + $0xb4] sm:$0xff]
        %v713 = vld [vmem:[#allocation17 + $0xbc] sm:$0xf]
        %v714 = vld [vmem:[#allocation18] sm:$0xff]
        %v715 = vld [vmem:[#allocation18 + $0x8] sm:$0xf]
        %v716 = vld [vmem:[#allocation18 + $0xc] sm:$0xff]
        %v717 = vld [vmem:[#allocation18 + $0x14] sm:$0xf]
        %v718 = vld [vmem:[#allocation18 + $0x18] sm:$0xff]
        %v719 = vld [vmem:[#allocation18 + $0x20] sm:$0xf]
        %v720 = vld [vmem:[#allocation18 + $0x24] sm:$0xff]
        %v721 = vld [vmem:[#allocation18 + $0x2c] sm:$0xf]
        %v722 = vld [vmem:[#allocation18 + $0x30] sm:$0xff]
        %v723 = vld [vmem:[#allocation18 + $0x38] sm:$0xf]
        %v724 = vld [vmem:[#allocation18 + $0x3c] sm:$0xff]
        %v725 = vld [vmem:[#allocation18 + $0x44] sm:$0xf]
        %v726 = vld [vmem:[#allocation18 + $0x48] sm:$0xff]
        %v727 = vld [vmem:[#allocation18 + $0x50] sm:$0xf]
        %v728 = vld [vmem:[#allocation18 + $0x54] sm:$0xff]
        %v729 = vld [vmem:[#allocation18 + $0x5c] sm:$0xf]
        %v730 = vld [vmem:[#allocation18 + $0x60] sm:$0xff]
        %v731 = vld [vmem:[#allocation18 + $0x68] sm:$0xf]
        %v732 = vld [vmem:[#allocation18 + $0x6c] sm:$0xff]
        %v733 = vld [vmem:[#allocation18 + $0x74] sm:$0xf]
        %v734 = vld [vmem:[#allocation18 + $0x78] sm:$0xff]
        %v735 = vld [vmem:[#allocation18 + $0x80] sm:$0xf]
        %v736 = vld [vmem:[#allocation18 + $0x84] sm:$0xff]
        %v737 = vld [vmem:[#allocation18 + $0x8c] sm:$0xf]
        %v738 = vld [vmem:[#allocation18 + $0x90] sm:$0xff]
        %v739 = vld [vmem:[#allocation18 + $0x98] sm:$0xf]
        %v740 = vld [vmem:[#allocation18 + $0x9c] sm:$0xff]
        %v741 = vld [vmem:[#allocation18 + $0xa4] sm:$0xf]
        %v742 = vld [vmem:[#allocation18 + $0xa8] sm:$0xff]
        %v743 = vld [vmem:[#allocation18 + $0xb0] sm:$0xf]
        %v744 = vld [vmem:[#allocation18 + $0xb4] sm:$0xff]
        %v745 = vld [vmem:[#allocation18 + $0xbc] sm:$0xf]
        %v746 = vld [vmem:[#allocation11] sm:$0x3]
        %v747 = vld [vmem:[#allocation12] sm:$0x1]
        %v748 = vld [vmem:[#allocation14] sm:$0x1]
        %v749 = vld [vmem:[%s10] sm:$0x7]
        %v750 = vld [vmem:[%s11] sm:$0x7]
        %v751 = vld [vmem:[%s538] sm:$0xff]
        %v752 = vld [vmem:[%s538 + $0x8] sm:$0xff]
        %v753 = vld [vmem:[%s538 + $0x10] sm:$0xff]
        %v754 = vld [vmem:[%s538 + $0x18] sm:$0xff]
        %v755 = vmul.f32 %v751, %v751
        %v756 = vmul.f32 %v752, %v752
        %v757 = vmul.f32 %v753, %v753
        %v758 = vmul.f32 %v754, %v754
        %759 = vadd.xlane.f32.xlu0 %v755
        %v760 = vpop.xlane.xlu0 %759
        %761 = vadd.xlane.f32.xlu0 %v756
        %v762 = vpop.xlane.xlu0 %761
        %763 = vadd.xlane.f32.xlu0 %v757
        %v764 = vpop.xlane.xlu0 %763
        %765 = vadd.xlane.f32.xlu0 %v758
        %v766 = vpop.xlane.xlu0 %765
        %v767 = vmax.f32 %v760, 1e-24
        %v768 = vmax.f32 %v762, 1e-24
        %v769 = vmax.f32 %v764, 1e-24
        %v770 = vmax.f32 %v766, 1e-24
        %v771 = vrsqrt.pop %v767
        %v772 = vmul.f32 %v771, %v767
        %v773 = vmul.f32 %v772, %v771
        %v774 = vmul.f32 0.5, %v773
        %v775 = vsub.f32 1.5, %v774
        %v776 = vmul.f32 %v771, %v775
        %vm777 = vweird.f32 %v767
        %vm778 = vweird.f32 %v771
        %vm779 = vmor %vm777, %vm778
        %v780 = vsel %vm779, %v771, %v776
        %v781 = vrsqrt.pop %v768
        %v782 = vmul.f32 %v781, %v768
        %v783 = vmul.f32 %v782, %v781
        %v784 = vmul.f32 0.5, %v783
        %v785 = vsub.f32 1.5, %v784
        %v786 = vmul.f32 %v781, %v785
        %vm787 = vweird.f32 %v768
        %vm788 = vweird.f32 %v781
        %vm789 = vmor %vm787, %vm788
        %v790 = vsel %vm789, %v781, %v786
        %v791 = vrsqrt.pop %v769
        %v792 = vmul.f32 %v791, %v769
        %v793 = vmul.f32 %v792, %v791
        %v794 = vmul.f32 0.5, %v793
        %v795 = vsub.f32 1.5, %v794
        %v796 = vmul.f32 %v791, %v795
        %vm797 = vweird.f32 %v769
        %vm798 = vweird.f32 %v791
        %vm799 = vmor %vm797, %vm798
        %v800 = vsel %vm799, %v791, %v796
        %v801 = vrsqrt.pop %v770
        %v802 = vmul.f32 %v801, %v770
        %v803 = vmul.f32 %v802, %v801
        %v804 = vmul.f32 0.5, %v803
        %v805 = vsub.f32 1.5, %v804
        %v806 = vmul.f32 %v801, %v805
        %vm807 = vweird.f32 %v770
        %vm808 = vweird.f32 %v801
        %vm809 = vmor %vm807, %vm808
        %v810 = vsel %vm809, %v801, %v806
        %v811 = vmul.f32 %v751, %v780
        %v812 = vmul.f32 %v752, %v790
        %v813 = vmul.f32 %v753, %v800
        %v814 = vmul.f32 %v754, %v810
        %815 = vst [vmem:[#allocation2] sm:$0xff] %v811
        %816 = vst [vmem:[#allocation2 + $0x8] sm:$0xff] %v812
        %817 = vst [vmem:[#allocation2 + $0x10] sm:$0xff] %v813
        %818 = vst [vmem:[#allocation2 + $0x18] sm:$0xff] %v814
        %v819 = vld [vmem:[#allocation2] sm:$0xff]
        %v820 = vld [vmem:[#allocation2 + $0x8] sm:$0xff]
        %v821 = vld [vmem:[#allocation2 + $0x10] sm:$0xff]
        %v822 = vld [vmem:[#allocation2 + $0x18] sm:$0xff]
        %v823 = vpack.c.bf16 %v820, %v819
        %v824 = vpack.c.bf16 %v822, %v821
        %v826 = vperm.slane %v746, 0
        %v827 = vperm.slane %v746, 1
        %v846 = vunpack.c.l.b16 %v634
        %v847 = vunpack.c.h.b16 %v634
        %v848 = vunpack.c.l.b16 %v635
        %v849 = vunpack.c.h.b16 %v635
        %v850 = vunpack.c.l.b16 %v636
        %v851 = vunpack.c.h.b16 %v636
        %v852 = vunpack.c.l.b16 %v637
        %v853 = vunpack.c.h.b16 %v637
        %v854 = vunpack.c.l.b16 %v638
        %v855 = vunpack.c.h.b16 %v638
        %v856 = vunpack.c.l.b16 %v639
        %v857 = vunpack.c.h.b16 %v639
        %v858 = vunpack.c.l.b16 %v640
        %v859 = vunpack.c.h.b16 %v640
        %v860 = vunpack.c.l.b16 %v641
        %v861 = vunpack.c.h.b16 %v641
        %v862 = vunpack.c.l.b16 %v642
        %v863 = vunpack.c.h.b16 %v642
        %v864 = vunpack.c.l.b16 %v643
        %v865 = vunpack.c.h.b16 %v643
        %v866 = vunpack.c.l.b16 %v644
        %v867 = vunpack.c.h.b16 %v644
        %v868 = vunpack.c.l.b16 %v645
        %v869 = vunpack.c.h.b16 %v645
        %v870 = vunpack.c.l.b16 %v646
        %v871 = vunpack.c.h.b16 %v646
        %v872 = vunpack.c.l.b16 %v647
        %v873 = vunpack.c.h.b16 %v647
        %v874 = vunpack.c.l.b16 %v648
        %v875 = vunpack.c.h.b16 %v648
        %v876 = vunpack.c.l.b16 %v649
        %v877 = vunpack.c.h.b16 %v649
        %v878 = vpack.c.b16 %v848, %v846
        %v879 = vpack.c.b16 %v849, %v847
        %v880 = vpack.c.b16 %v852, %v850
        %v881 = vpack.c.b16 %v853, %v851
        %v882 = vpack.c.b16 %v856, %v854
        %v883 = vpack.c.b16 %v857, %v855
        %v884 = vpack.c.b16 %v860, %v858
        %v885 = vpack.c.b16 %v861, %v859
        %v886 = vpack.c.b16 %v864, %v862
        %v887 = vpack.c.b16 %v865, %v863
        %v888 = vpack.c.b16 %v868, %v866
        %v889 = vpack.c.b16 %v869, %v867
        %v890 = vpack.c.b16 %v872, %v870
        %v891 = vpack.c.b16 %v873, %v871
        %v892 = vpack.c.b16 %v876, %v874
        %v893 = vpack.c.b16 %v877, %v875
        %910 = vmatpush.bf16.msra.mxu0 %v892
        %911 = vmatpush.bf16.msra.mxu0 %v890
        %912 = vmatpush.bf16.msra.mxu0 %v888
        %913 = vmatpush.bf16.msra.mxu0 %v886
        %914 = vmatpush.bf16.msra.mxu0 %v884
        %915 = vmatpush.bf16.msra.mxu0 %v882
        %916 = vmatpush.bf16.msra.mxu0 %v880
        %917 = vmatpush.bf16.msra.mxu0 %v878
        %918 = vmatmul.bf16.gmra.mxu0 %v823
        %v919 = vpop.f32.mrf.mxu0
        %v920 = vadd.f32 %v826, %v919
        %v921 = vpop.f32.mrf.mxu0
        %v922 = vadd.f32 %v826, %v921
        %923 = vmatmul.bf16.gmra.mxu0 %v824
        %v924 = vpop.f32.mrf.mxu0
        %v925 = vadd.f32 %v826, %v924
        %v926 = vpop.f32.mrf.mxu0
        %v927 = vadd.f32 %v826, %v926
        %928 = vdwg.mxu0
        %929 = vmatpush.bf16.msra.mxu0 %v893
        %930 = vmatpush.bf16.msra.mxu0 %v891
        %931 = vmatpush.bf16.msra.mxu0 %v889
        %932 = vmatpush.bf16.msra.mxu0 %v887
        %933 = vmatpush.bf16.msra.mxu0 %v885
        %934 = vmatpush.bf16.msra.mxu0 %v883
        %935 = vmatpush.bf16.msra.mxu0 %v881
        %936 = vmatpush.bf16.msra.mxu0 %v879
        %937 = vmatmul.bf16.gmra.mxu0 %v823
        %v938 = vpop.f32.mrf.mxu0
        %v939 = vadd.f32 %v827, %v938
        %v940 = vpop.f32.mrf.mxu0
        %v941 = vadd.f32 %v827, %v940
        %942 = vmatmul.bf16.gmra.mxu0 %v824
        %v943 = vpop.f32.mrf.mxu0
        %v944 = vadd.f32 %v827, %v943
        %v945 = vpop.f32.mrf.mxu0
        %v946 = vadd.f32 %v827, %v945
        %947 = vdwg.mxu0
        %v948 = vpack.c.bf16 %v922, %v920
        %v949 = vpack.c.bf16 %v927, %v925
        %v951 = vperm.slane %v747, 0
        %v957 = vunpack.c.l.b16 %v626
        %v958 = vunpack.c.l.b16 %v627
        %v959 = vunpack.c.l.b16 %v628
        %v960 = vunpack.c.l.b16 %v629
        %v961 = vpack.c.b16 %v958, %v957
        %v962 = vpack.c.b16 %v960, %v959
        %vm963 = vcmask 261120
        %v965 = vsel %vm963, %v961, 0
        %v968 = vsel %vm963, %v962, 0
        %970 = vmatpush.bf16.msra.mxu0 0
        %971 = vmatpush.bf16.msra.mxu0 0
        %972 = vmatpush.bf16.msra.mxu0 0
        %973 = vmatpush.bf16.msra.mxu0 0
        %974 = vmatpush.bf16.msra.mxu0 0
        %975 = vmatpush.bf16.msra.mxu0 0
        %976 = vmatpush.bf16.msra.mxu0 %v949
        %977 = vmatpush.bf16.msra.mxu0 %v948
        %978 = vmatmul.bf16.gmra.mxu0 %v965
        %v979 = vpop.f32.mrf.mxu0
        %v980 = vadd.f32 %v951, %v979
        %v981 = vpop.f32.mrf.mxu0
        %v982 = vadd.f32 %v951, %v981
        %983 = vmatmul.bf16.gmra.mxu0 %v968
        %v984 = vpop.f32.mrf.mxu0
        %v985 = vadd.f32 %v951, %v984
        %v986 = vpop.f32.mrf.mxu0
        %v987 = vadd.f32 %v951, %v986
        %988 = vdwg.mxu0
        %v989 = vpack.c.bf16 %v941, %v939
        %v990 = vpack.c.bf16 %v946, %v944
        %v992 = vperm.slane %v748, 0
        %v998 = vunpack.c.l.b16 %v630
        %v999 = vunpack.c.l.b16 %v631
        %v1000 = vunpack.c.l.b16 %v632
        %v1001 = vunpack.c.l.b16 %v633
        %v1002 = vpack.c.b16 %v999, %v998
        %v1003 = vpack.c.b16 %v1001, %v1000
        %v1005 = vsel %vm963, %v1002, 0
        %v1008 = vsel %vm963, %v1003, 0
        %1010 = vmatpush.bf16.msra.mxu0 0
        %1011 = vmatpush.bf16.msra.mxu0 0
        %1012 = vmatpush.bf16.msra.mxu0 0
        %1013 = vmatpush.bf16.msra.mxu0 0
        %1014 = vmatpush.bf16.msra.mxu0 0
        %1015 = vmatpush.bf16.msra.mxu0 0
        %1016 = vmatpush.bf16.msra.mxu0 %v990
        %1017 = vmatpush.bf16.msra.mxu0 %v989
        %1018 = vmatmul.bf16.gmra.mxu0 %v1005
        %v1019 = vpop.f32.mrf.mxu0
        %v1020 = vadd.f32 %v992, %v1019
        %v1021 = vpop.f32.mrf.mxu0
        %v1022 = vadd.f32 %v992, %v1021
        %1023 = vmatmul.bf16.gmra.mxu0 %v1008
        %v1024 = vpop.f32.mrf.mxu0
        %v1025 = vadd.f32 %v992, %v1024
        %v1026 = vpop.f32.mrf.mxu0
        %v1027 = vadd.f32 %v992, %v1026
        %1028 = vdwg.mxu0
        %v1029 = vpack.c.bf16 %v982, %v980
        %v1030 = vpack.c.bf16 %v987, %v985
        %v1031 = vpack.c.bf16 %v1022, %v1020
        %v1032 = vpack.c.bf16 %v1027, %v1025
        %v1065 = vunpack.c.l.b16 %v682
        %v1066 = vunpack.c.h.b16 %v682
        %v1067 = vunpack.c.l.b16 %v683
        %v1068 = vunpack.c.l.b16 %v684
        %v1069 = vunpack.c.h.b16 %v684
        %v1070 = vunpack.c.l.b16 %v685
        %v1071 = vunpack.c.l.b16 %v686
        %v1072 = vunpack.c.h.b16 %v686
        %v1073 = vunpack.c.l.b16 %v687
        %v1074 = vunpack.c.l.b16 %v688
        %v1075 = vunpack.c.h.b16 %v688
        %v1076 = vunpack.c.l.b16 %v689
        %v1077 = vunpack.c.l.b16 %v690
        %v1078 = vunpack.c.h.b16 %v690
        %v1079 = vunpack.c.l.b16 %v691
        %v1080 = vunpack.c.l.b16 %v692
        %v1081 = vunpack.c.h.b16 %v692
        %v1082 = vunpack.c.l.b16 %v693
        %v1083 = vunpack.c.l.b16 %v694
        %v1084 = vunpack.c.h.b16 %v694
        %v1085 = vunpack.c.l.b16 %v695
        %v1086 = vunpack.c.l.b16 %v696
        %v1087 = vunpack.c.h.b16 %v696
        %v1088 = vunpack.c.l.b16 %v697
        %v1089 = vunpack.c.l.b16 %v698
        %v1090 = vunpack.c.h.b16 %v698
        %v1091 = vunpack.c.l.b16 %v699
        %v1092 = vunpack.c.l.b16 %v700
        %v1093 = vunpack.c.h.b16 %v700
        %v1094 = vunpack.c.l.b16 %v701
        %v1095 = vunpack.c.l.b16 %v702
        %v1096 = vunpack.c.h.b16 %v702
        %v1097 = vunpack.c.l.b16 %v703
        %v1098 = vunpack.c.l.b16 %v704
        %v1099 = vunpack.c.h.b16 %v704
        %v1100 = vunpack.c.l.b16 %v705
        %v1101 = vunpack.c.l.b16 %v706
        %v1102 = vunpack.c.h.b16 %v706
        %v1103 = vunpack.c.l.b16 %v707
        %v1104 = vunpack.c.l.b16 %v708
        %v1105 = vunpack.c.h.b16 %v708
        %v1106 = vunpack.c.l.b16 %v709
        %v1107 = vunpack.c.l.b16 %v710
        %v1108 = vunpack.c.h.b16 %v710
        %v1109 = vunpack.c.l.b16 %v711
        %v1110 = vunpack.c.l.b16 %v712
        %v1111 = vunpack.c.h.b16 %v712
        %v1112 = vunpack.c.l.b16 %v713
        %v1113 = vpack.c.b16 %v1068, %v1065
        %v1114 = vpack.c.b16 %v1069, %v1066
        %v1115 = vpack.c.b16 %v1070, %v1067
        %v1116 = vpack.c.b16 %v1074, %v1071
        %v1117 = vpack.c.b16 %v1075, %v1072
        %v1118 = vpack.c.b16 %v1076, %v1073
        %v1119 = vpack.c.b16 %v1080, %v1077
        %v1120 = vpack.c.b16 %v1081, %v1078
        %v1121 = vpack.c.b16 %v1082, %v1079
        %v1122 = vpack.c.b16 %v1086, %v1083
        %v1123 = vpack.c.b16 %v1087, %v1084
        %v1124 = vpack.c.b16 %v1088, %v1085
        %v1125 = vpack.c.b16 %v1092, %v1089
        %v1126 = vpack.c.b16 %v1093, %v1090
        %v1127 = vpack.c.b16 %v1094, %v1091
        %v1128 = vpack.c.b16 %v1098, %v1095
        %v1129 = vpack.c.b16 %v1099, %v1096
        %v1130 = vpack.c.b16 %v1100, %v1097
        %v1131 = vpack.c.b16 %v1104, %v1101
        %v1132 = vpack.c.b16 %v1105, %v1102
        %v1133 = vpack.c.b16 %v1106, %v1103
        %v1134 = vpack.c.b16 %v1110, %v1107
        %v1135 = vpack.c.b16 %v1111, %v1108
        %v1136 = vpack.c.b16 %v1112, %v1109
        %1161 = vmatpush.bf16.msra.mxu0 %v1134
        %1162 = vmatpush.bf16.msra.mxu0 %v1131
        %1163 = vmatpush.bf16.msra.mxu0 %v1128
        %1164 = vmatpush.bf16.msra.mxu0 %v1125
        %1165 = vmatpush.bf16.msra.mxu0 %v1122
        %1166 = vmatpush.bf16.msra.mxu0 %v1119
        %1167 = vmatpush.bf16.msra.mxu0 %v1116
        %1168 = vmatpush.bf16.msra.mxu0 %v1113
        %1169 = vmatmul.bf16.gmra.mxu0 %v1031
        %v1170 = vpop.f32.mrf.mxu0
        %v1171 = vadd.f32 0.0, %v1170
        %v1172 = vpop.f32.mrf.mxu0
        %v1173 = vadd.f32 0.0, %v1172
        %1174 = vmatmul.bf16.gmra.mxu0 %v1032
        %v1175 = vpop.f32.mrf.mxu0
        %v1176 = vadd.f32 0.0, %v1175
        %v1177 = vpop.f32.mrf.mxu0
        %v1178 = vadd.f32 0.0, %v1177
        %1179 = vdwg.mxu0
        %1180 = vmatpush.bf16.msra.mxu0 %v1135
        %1181 = vmatpush.bf16.msra.mxu0 %v1132
        %1182 = vmatpush.bf16.msra.mxu0 %v1129
        %1183 = vmatpush.bf16.msra.mxu0 %v1126
        %1184 = vmatpush.bf16.msra.mxu0 %v1123
        %1185 = vmatpush.bf16.msra.mxu0 %v1120
        %1186 = vmatpush.bf16.msra.mxu0 %v1117
        %1187 = vmatpush.bf16.msra.mxu0 %v1114
        %1188 = vmatmul.bf16.gmra.mxu0 %v1031
        %v1189 = vpop.f32.mrf.mxu0
        %v1190 = vadd.f32 0.0, %v1189
        %v1191 = vpop.f32.mrf.mxu0
        %v1192 = vadd.f32 0.0, %v1191
        %1193 = vmatmul.bf16.gmra.mxu0 %v1032
        %v1194 = vpop.f32.mrf.mxu0
        %v1195 = vadd.f32 0.0, %v1194
        %v1196 = vpop.f32.mrf.mxu0
        %v1197 = vadd.f32 0.0, %v1196
        %1198 = vdwg.mxu0
        %1199 = vmatpush.bf16.msra.mxu0 %v1136
        %1200 = vmatpush.bf16.msra.mxu0 %v1133
        %1201 = vmatpush.bf16.msra.mxu0 %v1130
        %1202 = vmatpush.bf16.msra.mxu0 %v1127
        %1203 = vmatpush.bf16.msra.mxu0 %v1124
        %1204 = vmatpush.bf16.msra.mxu0 %v1121
        %1205 = vmatpush.bf16.msra.mxu0 %v1118
        %1206 = vmatpush.bf16.msra.mxu0 %v1115
        %1207 = vmatmul.bf16.gmra.mxu0 %v1031
        %v1208 = vpop.f32.mrf.mxu0
        %v1209 = vadd.f32 0.0, %v1208
        %v1210 = vpop.f32.mrf.mxu0
        %v1211 = vadd.f32 0.0, %v1210
        %1212 = vmatmul.bf16.gmra.mxu0 %v1032
        %v1213 = vpop.f32.mrf.mxu0
        %v1214 = vadd.f32 0.0, %v1213
        %v1215 = vpop.f32.mrf.mxu0
        %v1216 = vadd.f32 0.0, %v1215
        %1217 = vdwg.mxu0
        %v1250 = vunpack.c.l.b16 %v650
        %v1251 = vunpack.c.h.b16 %v650
        %v1252 = vunpack.c.l.b16 %v651
        %v1253 = vunpack.c.l.b16 %v652
        %v1254 = vunpack.c.h.b16 %v652
        %v1255 = vunpack.c.l.b16 %v653
        %v1256 = vunpack.c.l.b16 %v654
        %v1257 = vunpack.c.h.b16 %v654
        %v1258 = vunpack.c.l.b16 %v655
        %v1259 = vunpack.c.l.b16 %v656
        %v1260 = vunpack.c.h.b16 %v656
        %v1261 = vunpack.c.l.b16 %v657
        %v1262 = vunpack.c.l.b16 %v658
        %v1263 = vunpack.c.h.b16 %v658
        %v1264 = vunpack.c.l.b16 %v659
        %v1265 = vunpack.c.l.b16 %v660
        %v1266 = vunpack.c.h.b16 %v660
        %v1267 = vunpack.c.l.b16 %v661
        %v1268 = vunpack.c.l.b16 %v662
        %v1269 = vunpack.c.h.b16 %v662
        %v1270 = vunpack.c.l.b16 %v663
        %v1271 = vunpack.c.l.b16 %v664
        %v1272 = vunpack.c.h.b16 %v664
        %v1273 = vunpack.c.l.b16 %v665
        %v1274 = vunpack.c.l.b16 %v666
        %v1275 = vunpack.c.h.b16 %v666
        %v1276 = vunpack.c.l.b16 %v667
        %v1277 = vunpack.c.l.b16 %v668
        %v1278 = vunpack.c.h.b16 %v668
        %v1279 = vunpack.c.l.b16 %v669
        %v1280 = vunpack.c.l.b16 %v670
        %v1281 = vunpack.c.h.b16 %v670
        %v1282 = vunpack.c.l.b16 %v671
        %v1283 = vunpack.c.l.b16 %v672
        %v1284 = vunpack.c.h.b16 %v672
        %v1285 = vunpack.c.l.b16 %v673
        %v1286 = vunpack.c.l.b16 %v674
        %v1287 = vunpack.c.h.b16 %v674
        %v1288 = vunpack.c.l.b16 %v675
        %v1289 = vunpack.c.l.b16 %v676
        %v1290 = vunpack.c.h.b16 %v676
        %v1291 = vunpack.c.l.b16 %v677
        %v1292 = vunpack.c.l.b16 %v678
        %v1293 = vunpack.c.h.b16 %v678
        %v1294 = vunpack.c.l.b16 %v679
        %v1295 = vunpack.c.l.b16 %v680
        %v1296 = vunpack.c.h.b16 %v680
        %v1297 = vunpack.c.l.b16 %v681
        %v1298 = vpack.c.b16 %v1253, %v1250
        %v1299 = vpack.c.b16 %v1254, %v1251
        %v1300 = vpack.c.b16 %v1255, %v1252
        %v1301 = vpack.c.b16 %v1259, %v1256
        %v1302 = vpack.c.b16 %v1260, %v1257
        %v1303 = vpack.c.b16 %v1261, %v1258
        %v1304 = vpack.c.b16 %v1265, %v1262
        %v1305 = vpack.c.b16 %v1266, %v1263
        %v1306 = vpack.c.b16 %v1267, %v1264
        %v1307 = vpack.c.b16 %v1271, %v1268
        %v1308 = vpack.c.b16 %v1272, %v1269
        %v1309 = vpack.c.b16 %v1273, %v1270
        %v1310 = vpack.c.b16 %v1277, %v1274
        %v1311 = vpack.c.b16 %v1278, %v1275
        %v1312 = vpack.c.b16 %v1279, %v1276
        %v1313 = vpack.c.b16 %v1283, %v1280
        %v1314 = vpack.c.b16 %v1284, %v1281
        %v1315 = vpack.c.b16 %v1285, %v1282
        %v1316 = vpack.c.b16 %v1289, %v1286
        %v1317 = vpack.c.b16 %v1290, %v1287
        %v1318 = vpack.c.b16 %v1291, %v1288
        %v1319 = vpack.c.b16 %v1295, %v1292
        %v1320 = vpack.c.b16 %v1296, %v1293
        %v1321 = vpack.c.b16 %v1297, %v1294
        %1346 = vmatpush.bf16.msra.mxu0 %v1319
        %1347 = vmatpush.bf16.msra.mxu0 %v1316
        %1348 = vmatpush.bf16.msra.mxu0 %v1313
        %1349 = vmatpush.bf16.msra.mxu0 %v1310
        %1350 = vmatpush.bf16.msra.mxu0 %v1307
        %1351 = vmatpush.bf16.msra.mxu0 %v1304
        %1352 = vmatpush.bf16.msra.mxu0 %v1301
        %1353 = vmatpush.bf16.msra.mxu0 %v1298
        %1354 = vmatmul.bf16.gmra.mxu0 %v1029
        %v1355 = vpop.f32.mrf.mxu0
        %v1356 = vadd.f32 %v1171, %v1355
        %v1357 = vpop.f32.mrf.mxu0
        %v1358 = vadd.f32 %v1173, %v1357
        %1359 = vmatmul.bf16.gmra.mxu0 %v1030
        %v1360 = vpop.f32.mrf.mxu0
        %v1361 = vadd.f32 %v1176, %v1360
        %v1362 = vpop.f32.mrf.mxu0
        %v1363 = vadd.f32 %v1178, %v1362
        %1364 = vdwg.mxu0
        %1365 = vmatpush.bf16.msra.mxu0 %v1320
        %1366 = vmatpush.bf16.msra.mxu0 %v1317
        %1367 = vmatpush.bf16.msra.mxu0 %v1314
        %1368 = vmatpush.bf16.msra.mxu0 %v1311
        %1369 = vmatpush.bf16.msra.mxu0 %v1308
        %1370 = vmatpush.bf16.msra.mxu0 %v1305
        %1371 = vmatpush.bf16.msra.mxu0 %v1302
        %1372 = vmatpush.bf16.msra.mxu0 %v1299
        %1373 = vmatmul.bf16.gmra.mxu0 %v1029
        %v1374 = vpop.f32.mrf.mxu0
        %v1375 = vadd.f32 %v1190, %v1374
        %v1376 = vpop.f32.mrf.mxu0
        %v1377 = vadd.f32 %v1192, %v1376
        %1378 = vmatmul.bf16.gmra.mxu0 %v1030
        %v1379 = vpop.f32.mrf.mxu0
        %v1380 = vadd.f32 %v1195, %v1379
        %v1381 = vpop.f32.mrf.mxu0
        %v1382 = vadd.f32 %v1197, %v1381
        %1383 = vdwg.mxu0
        %1384 = vmatpush.bf16.msra.mxu0 %v1321
        %1385 = vmatpush.bf16.msra.mxu0 %v1318
        %1386 = vmatpush.bf16.msra.mxu0 %v1315
        %1387 = vmatpush.bf16.msra.mxu0 %v1312
        %1388 = vmatpush.bf16.msra.mxu0 %v1309
        %1389 = vmatpush.bf16.msra.mxu0 %v1306
        %1390 = vmatpush.bf16.msra.mxu0 %v1303
        %1391 = vmatpush.bf16.msra.mxu0 %v1300
        %1392 = vmatmul.bf16.gmra.mxu0 %v1029
        %v1393 = vpop.f32.mrf.mxu0
        %v1394 = vadd.f32 %v1209, %v1393
        %v1395 = vpop.f32.mrf.mxu0
        %v1396 = vadd.f32 %v1211, %v1395
        %1397 = vmatmul.bf16.gmra.mxu0 %v1030
        %v1398 = vpop.f32.mrf.mxu0
        %v1399 = vadd.f32 %v1214, %v1398
        %v1400 = vpop.f32.mrf.mxu0
        %v1401 = vadd.f32 %v1216, %v1400
        %1402 = vdwg.mxu0
        %v1404 = vperm.slane %v749, 0
        %v1405 = vperm.slane %v749, 1
        %v1406 = vperm.slane %v749, 2
        %v1410 = vadd.f32 %v1356, %v1404
        %v1411 = vadd.f32 %v1375, %v1405
        %v1412 = vadd.f32 %v1394, %v1406
        %v1413 = vadd.f32 %v1358, %v1404
        %v1414 = vadd.f32 %v1377, %v1405
        %v1415 = vadd.f32 %v1396, %v1406
        %v1416 = vadd.f32 %v1361, %v1404
        %v1417 = vadd.f32 %v1380, %v1405
        %v1418 = vadd.f32 %v1399, %v1406
        %v1419 = vadd.f32 %v1363, %v1404
        %v1420 = vadd.f32 %v1382, %v1405
        %v1421 = vadd.f32 %v1401, %v1406
        %v1423 = vperm.slane %v750, 0
        %v1424 = vperm.slane %v750, 1
        %v1425 = vperm.slane %v750, 2
        %v1461 = vunpack.c.l.b16 %v714
        %v1462 = vunpack.c.h.b16 %v714
        %v1463 = vunpack.c.l.b16 %v715
        %v1464 = vunpack.c.l.b16 %v716
        %v1465 = vunpack.c.h.b16 %v716
        %v1466 = vunpack.c.l.b16 %v717
        %v1467 = vunpack.c.l.b16 %v718
        %v1468 = vunpack.c.h.b16 %v718
        %v1469 = vunpack.c.l.b16 %v719
        %v1470 = vunpack.c.l.b16 %v720
        %v1471 = vunpack.c.h.b16 %v720
        %v1472 = vunpack.c.l.b16 %v721
        %v1473 = vunpack.c.l.b16 %v722
        %v1474 = vunpack.c.h.b16 %v722
        %v1475 = vunpack.c.l.b16 %v723
        %v1476 = vunpack.c.l.b16 %v724
        %v1477 = vunpack.c.h.b16 %v724
        %v1478 = vunpack.c.l.b16 %v725
        %v1479 = vunpack.c.l.b16 %v726
        %v1480 = vunpack.c.h.b16 %v726
        %v1481 = vunpack.c.l.b16 %v727
        %v1482 = vunpack.c.l.b16 %v728
        %v1483 = vunpack.c.h.b16 %v728
        %v1484 = vunpack.c.l.b16 %v729
        %v1485 = vunpack.c.l.b16 %v730
        %v1486 = vunpack.c.h.b16 %v730
        %v1487 = vunpack.c.l.b16 %v731
        %v1488 = vunpack.c.l.b16 %v732
        %v1489 = vunpack.c.h.b16 %v732
        %v1490 = vunpack.c.l.b16 %v733
        %v1491 = vunpack.c.l.b16 %v734
        %v1492 = vunpack.c.h.b16 %v734
        %v1493 = vunpack.c.l.b16 %v735
        %v1494 = vunpack.c.l.b16 %v736
        %v1495 = vunpack.c.h.b16 %v736
        %v1496 = vunpack.c.l.b16 %v737
        %v1497 = vunpack.c.l.b16 %v738
        %v1498 = vunpack.c.h.b16 %v738
        %v1499 = vunpack.c.l.b16 %v739
        %v1500 = vunpack.c.l.b16 %v740
        %v1501 = vunpack.c.h.b16 %v740
        %v1502 = vunpack.c.l.b16 %v741
        %v1503 = vunpack.c.l.b16 %v742
        %v1504 = vunpack.c.h.b16 %v742
        %v1505 = vunpack.c.l.b16 %v743
        %v1506 = vunpack.c.l.b16 %v744
        %v1507 = vunpack.c.h.b16 %v744
        %v1508 = vunpack.c.l.b16 %v745
        %v1509 = vpack.c.b16 %v1464, %v1461
        %v1510 = vpack.c.b16 %v1465, %v1462
        %v1511 = vpack.c.b16 %v1466, %v1463
        %v1512 = vpack.c.b16 %v1470, %v1467
        %v1513 = vpack.c.b16 %v1471, %v1468
        %v1514 = vpack.c.b16 %v1472, %v1469
        %v1515 = vpack.c.b16 %v1476, %v1473
        %v1516 = vpack.c.b16 %v1477, %v1474
        %v1517 = vpack.c.b16 %v1478, %v1475
        %v1518 = vpack.c.b16 %v1482, %v1479
        %v1519 = vpack.c.b16 %v1483, %v1480
        %v1520 = vpack.c.b16 %v1484, %v1481
        %v1521 = vpack.c.b16 %v1488, %v1485
        %v1522 = vpack.c.b16 %v1489, %v1486
        %v1523 = vpack.c.b16 %v1490, %v1487
        %v1524 = vpack.c.b16 %v1494, %v1491
        %v1525 = vpack.c.b16 %v1495, %v1492
        %v1526 = vpack.c.b16 %v1496, %v1493
        %v1527 = vpack.c.b16 %v1500, %v1497
        %v1528 = vpack.c.b16 %v1501, %v1498
        %v1529 = vpack.c.b16 %v1502, %v1499
        %v1530 = vpack.c.b16 %v1506, %v1503
        %v1531 = vpack.c.b16 %v1507, %v1504
        %v1532 = vpack.c.b16 %v1508, %v1505
        %1557 = vmatpush.bf16.msra.mxu0 %v1530
        %1558 = vmatpush.bf16.msra.mxu0 %v1527
        %1559 = vmatpush.bf16.msra.mxu0 %v1524
        %1560 = vmatpush.bf16.msra.mxu0 %v1521
        %1561 = vmatpush.bf16.msra.mxu0 %v1518
        %1562 = vmatpush.bf16.msra.mxu0 %v1515
        %1563 = vmatpush.bf16.msra.mxu0 %v1512
        %1564 = vmatpush.bf16.msra.mxu0 %v1509
        %1565 = vmatmul.bf16.gmra.mxu0 %v823
        %v1566 = vpop.f32.mrf.mxu0
        %v1567 = vadd.f32 %v1423, %v1566
        %v1568 = vpop.f32.mrf.mxu0
        %v1569 = vadd.f32 %v1423, %v1568
        %1570 = vmatmul.bf16.gmra.mxu0 %v824
        %v1571 = vpop.f32.mrf.mxu0
        %v1572 = vadd.f32 %v1423, %v1571
        %v1573 = vpop.f32.mrf.mxu0
        %v1574 = vadd.f32 %v1423, %v1573
        %1575 = vdwg.mxu0
        %1576 = vmatpush.bf16.msra.mxu0 %v1531
        %1577 = vmatpush.bf16.msra.mxu0 %v1528
        %1578 = vmatpush.bf16.msra.mxu0 %v1525
        %1579 = vmatpush.bf16.msra.mxu0 %v1522
        %1580 = vmatpush.bf16.msra.mxu0 %v1519
        %1581 = vmatpush.bf16.msra.mxu0 %v1516
        %1582 = vmatpush.bf16.msra.mxu0 %v1513
        %1583 = vmatpush.bf16.msra.mxu0 %v1510
        %1584 = vmatmul.bf16.gmra.mxu0 %v823
        %v1585 = vpop.f32.mrf.mxu0
        %v1586 = vadd.f32 %v1424, %v1585
        %v1587 = vpop.f32.mrf.mxu0
        %v1588 = vadd.f32 %v1424, %v1587
        %1589 = vmatmul.bf16.gmra.mxu0 %v824
        %v1590 = vpop.f32.mrf.mxu0
        %v1591 = vadd.f32 %v1424, %v1590
        %v1592 = vpop.f32.mrf.mxu0
        %v1593 = vadd.f32 %v1424, %v1592
        %1594 = vdwg.mxu0
        %1595 = vmatpush.bf16.msra.mxu0 %v1532
        %1596 = vmatpush.bf16.msra.mxu0 %v1529
        %1597 = vmatpush.bf16.msra.mxu0 %v1526
        %1598 = vmatpush.bf16.msra.mxu0 %v1523
        %1599 = vmatpush.bf16.msra.mxu0 %v1520
        %1600 = vmatpush.bf16.msra.mxu0 %v1517
        %1601 = vmatpush.bf16.msra.mxu0 %v1514
        %1602 = vmatpush.bf16.msra.mxu0 %v1511
        %1603 = vmatmul.bf16.gmra.mxu0 %v823
        %v1604 = vpop.f32.mrf.mxu0
        %v1605 = vadd.f32 %v1425, %v1604
        %v1606 = vpop.f32.mrf.mxu0
        %v1607 = vadd.f32 %v1425, %v1606
        %1608 = vmatmul.bf16.gmra.mxu0 %v824
        %v1609 = vpop.f32.mrf.mxu0
        %v1610 = vadd.f32 %v1425, %v1609
        %v1611 = vpop.f32.mrf.mxu0
        %v1612 = vadd.f32 %v1425, %v1611
        %1613 = vdwg.mxu0
        %v1614 = vadd.f32 %v1410, %v1567
        %v1615 = vadd.f32 %v1413, %v1569
        %v1616 = vadd.f32 %v1416, %v1572
        %v1617 = vadd.f32 %v1419, %v1574
        %v1618 = vxor.u32 %v1614, 2147483648
        %v1619 = vxor.u32 %v1615, 2147483648
        %v1620 = vxor.u32 %v1616, 2147483648
        %v1621 = vxor.u32 %v1617, 2147483648
        %v1622 = vmul.f32 %v1618, 1.442695
        %v1623 = vpow.pop %v1622
        %v1624 = vmul.f32 %v1619, 1.442695
        %v1625 = vpow.pop %v1624
        %v1626 = vmul.f32 %v1620, 1.442695
        %v1627 = vpow.pop %v1626
        %v1628 = vmul.f32 %v1621, 1.442695
        %v1629 = vpow.pop %v1628
        %v1630 = vadd.f32 %v1623, 1.0
        %v1631 = vadd.f32 %v1625, 1.0
        %v1632 = vadd.f32 %v1627, 1.0
        %v1633 = vadd.f32 %v1629, 1.0
        %v1634 = vrcp.pop %v1630
        %v1635 = vmul.f32 %v1630, %v1634
        %v1636 = vsub.f32 1.0, %v1635
        %v1637 = vmul.f32 %v1634, %v1636
        %v1638 = vadd.f32 %v1634, %v1637
        %vm1639 = vweird.f32 %v1630
        %vm1640 = vweird.f32 %v1634
        %vm1641 = vmor %vm1639, %vm1640
        %v1642 = vsel %vm1641, %v1634, %v1638
        %v1643 = vand.u32 2147483647, %v1630
        %vm1644 = vcmp.eq.f32.partialorder %v1643, 8.507059e+37
        %v1645 = vand.u32 %v1630, 2147483648
        %v1646 = vor.u32 1.1754944e-38, %v1645
        %v1647 = vsel %vm1644, %v1646, %v1642
        %v1648 = vmul.f32 1.0, %v1647
        %v1649 = vrcp.pop %v1631
        %v1650 = vmul.f32 %v1631, %v1649
        %v1651 = vsub.f32 1.0, %v1650
        %v1652 = vmul.f32 %v1649, %v1651
        %v1653 = vadd.f32 %v1649, %v1652
        %vm1654 = vweird.f32 %v1631
        %vm1655 = vweird.f32 %v1649
        %vm1656 = vmor %vm1654, %vm1655
        %v1657 = vsel %vm1656, %v1649, %v1653
        %v1658 = vand.u32 2147483647, %v1631
        %vm1659 = vcmp.eq.f32.partialorder %v1658, 8.507059e+37
        %v1660 = vand.u32 %v1631, 2147483648
        %v1661 = vor.u32 1.1754944e-38, %v1660
        %v1662 = vsel %vm1659, %v1661, %v1657
        %v1663 = vmul.f32 1.0, %v1662
        %v1664 = vrcp.pop %v1632
        %v1665 = vmul.f32 %v1632, %v1664
        %v1666 = vsub.f32 1.0, %v1665
        %v1667 = vmul.f32 %v1664, %v1666
        %v1668 = vadd.f32 %v1664, %v1667
        %vm1669 = vweird.f32 %v1632
        %vm1670 = vweird.f32 %v1664
        %vm1671 = vmor %vm1669, %vm1670
        %v1672 = vsel %vm1671, %v1664, %v1668
        %v1673 = vand.u32 2147483647, %v1632
        %vm1674 = vcmp.eq.f32.partialorder %v1673, 8.507059e+37
        %v1675 = vand.u32 %v1632, 2147483648
        %v1676 = vor.u32 1.1754944e-38, %v1675
        %v1677 = vsel %vm1674, %v1676, %v1672
        %v1678 = vmul.f32 1.0, %v1677
        %v1679 = vrcp.pop %v1633
        %v1680 = vmul.f32 %v1633, %v1679
        %v1681 = vsub.f32 1.0, %v1680
        %v1682 = vmul.f32 %v1679, %v1681
        %v1683 = vadd.f32 %v1679, %v1682
        %vm1684 = vweird.f32 %v1633
        %vm1685 = vweird.f32 %v1679
        %vm1686 = vmor %vm1684, %vm1685
        %v1687 = vsel %vm1686, %v1679, %v1683
        %v1688 = vand.u32 2147483647, %v1633
        %vm1689 = vcmp.eq.f32.partialorder %v1688, 8.507059e+37
        %v1690 = vand.u32 %v1633, 2147483648
        %v1691 = vor.u32 1.1754944e-38, %v1690
        %v1692 = vsel %vm1689, %v1691, %v1687
        %v1693 = vmul.f32 1.0, %v1692
        %v1694 = vadd.f32 %v1411, %v1586
        %v1695 = vadd.f32 %v1414, %v1588
        %v1696 = vadd.f32 %v1417, %v1591
        %v1697 = vadd.f32 %v1420, %v1593
        %v1698 = vxor.u32 %v1694, 2147483648
        %v1699 = vxor.u32 %v1695, 2147483648
        %v1700 = vxor.u32 %v1696, 2147483648
        %v1701 = vxor.u32 %v1697, 2147483648
        %v1702 = vmul.f32 %v1698, 1.442695
        %v1703 = vpow.pop %v1702
        %v1704 = vmul.f32 %v1699, 1.442695
        %v1705 = vpow.pop %v1704
        %v1706 = vmul.f32 %v1700, 1.442695
        %v1707 = vpow.pop %v1706
        %v1708 = vmul.f32 %v1701, 1.442695
        %v1709 = vpow.pop %v1708
        %v1710 = vadd.f32 %v1703, 1.0
        %v1711 = vadd.f32 %v1705, 1.0
        %v1712 = vadd.f32 %v1707, 1.0
        %v1713 = vadd.f32 %v1709, 1.0
        %v1714 = vrcp.pop %v1710
        %v1715 = vmul.f32 %v1710, %v1714
        %v1716 = vsub.f32 1.0, %v1715
        %v1717 = vmul.f32 %v1714, %v1716
        %v1718 = vadd.f32 %v1714, %v1717
        %vm1719 = vweird.f32 %v1710
        %vm1720 = vweird.f32 %v1714
        %vm1721 = vmor %vm1719, %vm1720
        %v1722 = vsel %vm1721, %v1714, %v1718
        %v1723 = vand.u32 2147483647, %v1710
        %vm1724 = vcmp.eq.f32.partialorder %v1723, 8.507059e+37
        %v1725 = vand.u32 %v1710, 2147483648
        %v1726 = vor.u32 1.1754944e-38, %v1725
        %v1727 = vsel %vm1724, %v1726, %v1722
        %v1728 = vmul.f32 1.0, %v1727
        %v1729 = vrcp.pop %v1711
        %v1730 = vmul.f32 %v1711, %v1729
        %v1731 = vsub.f32 1.0, %v1730
        %v1732 = vmul.f32 %v1729, %v1731
        %v1733 = vadd.f32 %v1729, %v1732
        %vm1734 = vweird.f32 %v1711
        %vm1735 = vweird.f32 %v1729
        %vm1736 = vmor %vm1734, %vm1735
        %v1737 = vsel %vm1736, %v1729, %v1733
        %v1738 = vand.u32 2147483647, %v1711
        %vm1739 = vcmp.eq.f32.partialorder %v1738, 8.507059e+37
        %v1740 = vand.u32 %v1711, 2147483648
        %v1741 = vor.u32 1.1754944e-38, %v1740
        %v1742 = vsel %vm1739, %v1741, %v1737
        %v1743 = vmul.f32 1.0, %v1742
        %v1744 = vrcp.pop %v1712
        %v1745 = vmul.f32 %v1712, %v1744
        %v1746 = vsub.f32 1.0, %v1745
        %v1747 = vmul.f32 %v1744, %v1746
        %v1748 = vadd.f32 %v1744, %v1747
        %vm1749 = vweird.f32 %v1712
        %vm1750 = vweird.f32 %v1744
        %vm1751 = vmor %vm1749, %vm1750
        %v1752 = vsel %vm1751, %v1744, %v1748
        %v1753 = vand.u32 2147483647, %v1712
        %vm1754 = vcmp.eq.f32.partialorder %v1753, 8.507059e+37
        %v1755 = vand.u32 %v1712, 2147483648
        %v1756 = vor.u32 1.1754944e-38, %v1755
        %v1757 = vsel %vm1754, %v1756, %v1752
        %v1758 = vmul.f32 1.0, %v1757
        %v1759 = vrcp.pop %v1713
        %v1760 = vmul.f32 %v1713, %v1759
        %v1761 = vsub.f32 1.0, %v1760
        %v1762 = vmul.f32 %v1759, %v1761
        %v1763 = vadd.f32 %v1759, %v1762
        %vm1764 = vweird.f32 %v1713
        %vm1765 = vweird.f32 %v1759
        %vm1766 = vmor %vm1764, %vm1765
        %v1767 = vsel %vm1766, %v1759, %v1763
        %v1768 = vand.u32 2147483647, %v1713
        %vm1769 = vcmp.eq.f32.partialorder %v1768, 8.507059e+37
        %v1770 = vand.u32 %v1713, 2147483648
        %v1771 = vor.u32 1.1754944e-38, %v1770
        %v1772 = vsel %vm1769, %v1771, %v1767
        %v1773 = vmul.f32 1.0, %v1772
        %v1774 = vmul.f32 %v1648, %v1605
        %v1775 = vmul.f32 %v1663, %v1607
        %v1776 = vmul.f32 %v1678, %v1610
        %v1777 = vmul.f32 %v1693, %v1612
        %v1778 = vadd.f32 %v1412, %v1774
        %v1779 = vadd.f32 %v1415, %v1775
        %v1780 = vadd.f32 %v1418, %v1776
        %v1781 = vadd.f32 %v1421, %v1777
        %v1782 = vtanh.pop %v1778
        %v1783 = vtanh.pop %v1779
        %v1784 = vtanh.pop %v1780
        %v1785 = vtanh.pop %v1781
        %v1786 = vsub.f32 %v819, %v1782
        %v1787 = vsub.f32 %v820, %v1783
        %v1788 = vsub.f32 %v821, %v1784
        %v1789 = vsub.f32 %v822, %v1785
        %v1790 = vmul.f32 %v1728, %v1786
        %v1791 = vmul.f32 %v1743, %v1787
        %v1792 = vmul.f32 %v1758, %v1788
        %v1793 = vmul.f32 %v1773, %v1789
        %v1794 = vadd.f32 %v1782, %v1790
        %v1795 = vadd.f32 %v1783, %v1791
        %v1796 = vadd.f32 %v1784, %v1792
        %v1797 = vadd.f32 %v1785, %v1793
        %1798 = vst [vmem:[#allocation2] sm:$0xff] %v1794
        %1799 = vst [vmem:[#allocation2 + $0x8] sm:$0xff] %v1795
        %1800 = vst [vmem:[#allocation2 + $0x10] sm:$0xff] %v1796
        %1801 = vst [vmem:[#allocation2 + $0x18] sm:$0xff] %v1797
        %v1802 = vld [vmem:[#allocation2] sm:$0xff]
        %v1803 = vld [vmem:[#allocation2 + $0x8] sm:$0xff]
        %v1804 = vld [vmem:[#allocation2 + $0x10] sm:$0xff]
        %v1805 = vld [vmem:[#allocation2 + $0x18] sm:$0xff]
        %v1806 = vpack.c.bf16 %v1803, %v1802
        %v1807 = vpack.c.bf16 %v1805, %v1804
        %1808 = vmatpush.bf16.msra.mxu0 %v892
        %1809 = vmatpush.bf16.msra.mxu0 %v890
        %1810 = vmatpush.bf16.msra.mxu0 %v888
        %1811 = vmatpush.bf16.msra.mxu0 %v886
        %1812 = vmatpush.bf16.msra.mxu0 %v884
        %1813 = vmatpush.bf16.msra.mxu0 %v882
        %1814 = vmatpush.bf16.msra.mxu0 %v880
        %1815 = vmatpush.bf16.msra.mxu0 %v878
        %1816 = vmatmul.bf16.gmra.mxu0 %v1806
        %v1817 = vpop.f32.mrf.mxu0
        %v1818 = vadd.f32 %v826, %v1817
        %v1819 = vpop.f32.mrf.mxu0
        %v1820 = vadd.f32 %v826, %v1819
        %1821 = vmatmul.bf16.gmra.mxu0 %v1807
        %v1822 = vpop.f32.mrf.mxu0
        %v1823 = vadd.f32 %v826, %v1822
        %v1824 = vpop.f32.mrf.mxu0
        %v1825 = vadd.f32 %v826, %v1824
        %1826 = vdwg.mxu0
        %1827 = vmatpush.bf16.msra.mxu0 %v893
        %1828 = vmatpush.bf16.msra.mxu0 %v891
        %1829 = vmatpush.bf16.msra.mxu0 %v889
        %1830 = vmatpush.bf16.msra.mxu0 %v887
        %1831 = vmatpush.bf16.msra.mxu0 %v885
        %1832 = vmatpush.bf16.msra.mxu0 %v883
        %1833 = vmatpush.bf16.msra.mxu0 %v881
        %1834 = vmatpush.bf16.msra.mxu0 %v879
        %1835 = vmatmul.bf16.gmra.mxu0 %v1806
        %v1836 = vpop.f32.mrf.mxu0
        %v1837 = vadd.f32 %v827, %v1836
        %v1838 = vpop.f32.mrf.mxu0
        %v1839 = vadd.f32 %v827, %v1838
        %1840 = vmatmul.bf16.gmra.mxu0 %v1807
        %v1841 = vpop.f32.mrf.mxu0
        %v1842 = vadd.f32 %v827, %v1841
        %v1843 = vpop.f32.mrf.mxu0
        %v1844 = vadd.f32 %v827, %v1843
        %1845 = vdwg.mxu0
        %v1846 = vpack.c.bf16 %v1820, %v1818
        %v1847 = vpack.c.bf16 %v1825, %v1823
        %1848 = vmatpush.bf16.msra.mxu0 0
        %1849 = vmatpush.bf16.msra.mxu0 0
        %1850 = vmatpush.bf16.msra.mxu0 0
        %1851 = vmatpush.bf16.msra.mxu0 0
        %1852 = vmatpush.bf16.msra.mxu0 0
        %1853 = vmatpush.bf16.msra.mxu0 0
        %1854 = vmatpush.bf16.msra.mxu0 %v1847
        %1855 = vmatpush.bf16.msra.mxu0 %v1846
        %1856 = vmatmul.bf16.gmra.mxu0 %v965
        %v1857 = vpop.f32.mrf.mxu0
        %v1858 = vadd.f32 %v951, %v1857
        %v1859 = vpop.f32.mrf.mxu0
        %v1860 = vadd.f32 %v951, %v1859
        %1861 = vmatmul.bf16.gmra.mxu0 %v968
        %v1862 = vpop.f32.mrf.mxu0
        %v1863 = vadd.f32 %v951, %v1862
        %v1864 = vpop.f32.mrf.mxu0
        %v1865 = vadd.f32 %v951, %v1864
        %1866 = vdwg.mxu0
        %v1867 = vpack.c.bf16 %v1839, %v1837
        %v1868 = vpack.c.bf16 %v1844, %v1842
        %1869 = vmatpush.bf16.msra.mxu0 0
        %1870 = vmatpush.bf16.msra.mxu0 0
        %1871 = vmatpush.bf16.msra.mxu0 0
        %1872 = vmatpush.bf16.msra.mxu0 0
        %1873 = vmatpush.bf16.msra.mxu0 0
        %1874 = vmatpush.bf16.msra.mxu0 0
        %1875 = vmatpush.bf16.msra.mxu0 %v1868
        %1876 = vmatpush.bf16.msra.mxu0 %v1867
        %1877 = vmatmul.bf16.gmra.mxu0 %v1005
        %v1878 = vpop.f32.mrf.mxu0
        %v1879 = vadd.f32 %v992, %v1878
        %v1880 = vpop.f32.mrf.mxu0
        %v1881 = vadd.f32 %v992, %v1880
        %1882 = vmatmul.bf16.gmra.mxu0 %v1008
        %v1883 = vpop.f32.mrf.mxu0
        %v1884 = vadd.f32 %v992, %v1883
        %v1885 = vpop.f32.mrf.mxu0
        %v1886 = vadd.f32 %v992, %v1885
        %1887 = vdwg.mxu0
        %v1888 = vpack.c.bf16 %v1860, %v1858
        %v1889 = vpack.c.bf16 %v1865, %v1863
        %v1890 = vpack.c.bf16 %v1881, %v1879
        %v1891 = vpack.c.bf16 %v1886, %v1884
        %1892 = vmatpush.bf16.msra.mxu0 %v1134
        %1893 = vmatpush.bf16.msra.mxu0 %v1131
        %1894 = vmatpush.bf16.msra.mxu0 %v1128
        %1895 = vmatpush.bf16.msra.mxu0 %v1125
        %1896 = vmatpush.bf16.msra.mxu0 %v1122
        %1897 = vmatpush.bf16.msra.mxu0 %v1119
        %1898 = vmatpush.bf16.msra.mxu0 %v1116
        %1899 = vmatpush.bf16.msra.mxu0 %v1113
        %1900 = vmatmul.bf16.gmra.mxu0 %v1890
        %v1901 = vpop.f32.mrf.mxu0
        %v1902 = vadd.f32 0.0, %v1901
        %v1903 = vpop.f32.mrf.mxu0
        %v1904 = vadd.f32 0.0, %v1903
        %1905 = vmatmul.bf16.gmra.mxu0 %v1891
        %v1906 = vpop.f32.mrf.mxu0
        %v1907 = vadd.f32 0.0, %v1906
        %v1908 = vpop.f32.mrf.mxu0
        %v1909 = vadd.f32 0.0, %v1908
        %1910 = vdwg.mxu0
        %1911 = vmatpush.bf16.msra.mxu0 %v1135
        %1912 = vmatpush.bf16.msra.mxu0 %v1132
        %1913 = vmatpush.bf16.msra.mxu0 %v1129
        %1914 = vmatpush.bf16.msra.mxu0 %v1126
        %1915 = vmatpush.bf16.msra.mxu0 %v1123
        %1916 = vmatpush.bf16.msra.mxu0 %v1120
        %1917 = vmatpush.bf16.msra.mxu0 %v1117
        %1918 = vmatpush.bf16.msra.mxu0 %v1114
        %1919 = vmatmul.bf16.gmra.mxu0 %v1890
        %v1920 = vpop.f32.mrf.mxu0
        %v1921 = vadd.f32 0.0, %v1920
        %v1922 = vpop.f32.mrf.mxu0
        %v1923 = vadd.f32 0.0, %v1922
        %1924 = vmatmul.bf16.gmra.mxu0 %v1891
        %v1925 = vpop.f32.mrf.mxu0
        %v1926 = vadd.f32 0.0, %v1925
        %v1927 = vpop.f32.mrf.mxu0
        %v1928 = vadd.f32 0.0, %v1927
        %1929 = vdwg.mxu0
        %1930 = vmatpush.bf16.msra.mxu0 %v1136
        %1931 = vmatpush.bf16.msra.mxu0 %v1133
        %1932 = vmatpush.bf16.msra.mxu0 %v1130
        %1933 = vmatpush.bf16.msra.mxu0 %v1127
        %1934 = vmatpush.bf16.msra.mxu0 %v1124
        %1935 = vmatpush.bf16.msra.mxu0 %v1121
        %1936 = vmatpush.bf16.msra.mxu0 %v1118
        %1937 = vmatpush.bf16.msra.mxu0 %v1115
        %1938 = vmatmul.bf16.gmra.mxu0 %v1890
        %v1939 = vpop.f32.mrf.mxu0
        %v1940 = vadd.f32 0.0, %v1939
        %v1941 = vpop.f32.mrf.mxu0
        %v1942 = vadd.f32 0.0, %v1941
        %1943 = vmatmul.bf16.gmra.mxu0 %v1891
        %v1944 = vpop.f32.mrf.mxu0
        %v1945 = vadd.f32 0.0, %v1944
        %v1946 = vpop.f32.mrf.mxu0
        %v1947 = vadd.f32 0.0, %v1946
        %1948 = vdwg.mxu0
        %1949 = vmatpush.bf16.msra.mxu0 %v1319
        %1950 = vmatpush.bf16.msra.mxu0 %v1316
        %1951 = vmatpush.bf16.msra.mxu0 %v1313
        %1952 = vmatpush.bf16.msra.mxu0 %v1310
        %1953 = vmatpush.bf16.msra.mxu0 %v1307
        %1954 = vmatpush.bf16.msra.mxu0 %v1304
        %1955 = vmatpush.bf16.msra.mxu0 %v1301
        %1956 = vmatpush.bf16.msra.mxu0 %v1298
        %1957 = vmatmul.bf16.gmra.mxu0 %v1888
        %v1958 = vpop.f32.mrf.mxu0
        %v1959 = vadd.f32 %v1902, %v1958
        %v1960 = vpop.f32.mrf.mxu0
        %v1961 = vadd.f32 %v1904, %v1960
        %1962 = vmatmul.bf16.gmra.mxu0 %v1889
        %v1963 = vpop.f32.mrf.mxu0
        %v1964 = vadd.f32 %v1907, %v1963
        %v1965 = vpop.f32.mrf.mxu0
        %v1966 = vadd.f32 %v1909, %v1965
        %1967 = vdwg.mxu0
        %1968 = vmatpush.bf16.msra.mxu0 %v1320
        %1969 = vmatpush.bf16.msra.mxu0 %v1317
        %1970 = vmatpush.bf16.msra.mxu0 %v1314
        %1971 = vmatpush.bf16.msra.mxu0 %v1311
        %1972 = vmatpush.bf16.msra.mxu0 %v1308
        %1973 = vmatpush.bf16.msra.mxu0 %v1305
        %1974 = vmatpush.bf16.msra.mxu0 %v1302
        %1975 = vmatpush.bf16.msra.mxu0 %v1299
        %1976 = vmatmul.bf16.gmra.mxu0 %v1888
        %v1977 = vpop.f32.mrf.mxu0
        %v1978 = vadd.f32 %v1921, %v1977
        %v1979 = vpop.f32.mrf.mxu0
        %v1980 = vadd.f32 %v1923, %v1979
        %1981 = vmatmul.bf16.gmra.mxu0 %v1889
        %v1982 = vpop.f32.mrf.mxu0
        %v1983 = vadd.f32 %v1926, %v1982
        %v1984 = vpop.f32.mrf.mxu0
        %v1985 = vadd.f32 %v1928, %v1984
        %1986 = vdwg.mxu0
        %1987 = vmatpush.bf16.msra.mxu0 %v1321
        %1988 = vmatpush.bf16.msra.mxu0 %v1318
        %1989 = vmatpush.bf16.msra.mxu0 %v1315
        %1990 = vmatpush.bf16.msra.mxu0 %v1312
        %1991 = vmatpush.bf16.msra.mxu0 %v1309
        %1992 = vmatpush.bf16.msra.mxu0 %v1306
        %1993 = vmatpush.bf16.msra.mxu0 %v1303
        %1994 = vmatpush.bf16.msra.mxu0 %v1300
        %1995 = vmatmul.bf16.gmra.mxu0 %v1888
        %v1996 = vpop.f32.mrf.mxu0
        %v1997 = vadd.f32 %v1940, %v1996
        %v1998 = vpop.f32.mrf.mxu0
        %v1999 = vadd.f32 %v1942, %v1998
        %2000 = vmatmul.bf16.gmra.mxu0 %v1889
        %v2001 = vpop.f32.mrf.mxu0
        %v2002 = vadd.f32 %v1945, %v2001
        %v2003 = vpop.f32.mrf.mxu0
        %v2004 = vadd.f32 %v1947, %v2003
        %2005 = vdwg.mxu0
        %v2006 = vadd.f32 %v1959, %v1404
        %v2007 = vadd.f32 %v1978, %v1405
        %v2008 = vadd.f32 %v1997, %v1406
        %v2009 = vadd.f32 %v1961, %v1404
        %v2010 = vadd.f32 %v1980, %v1405
        %v2011 = vadd.f32 %v1999, %v1406
        %v2012 = vadd.f32 %v1964, %v1404
        %v2013 = vadd.f32 %v1983, %v1405
        %v2014 = vadd.f32 %v2002, %v1406
        %v2015 = vadd.f32 %v1966, %v1404
        %v2016 = vadd.f32 %v1985, %v1405
        %v2017 = vadd.f32 %v2004, %v1406
        %2018 = vmatpush.bf16.msra.mxu0 %v1530
        %2019 = vmatpush.bf16.msra.mxu0 %v1527
        %2020 = vmatpush.bf16.msra.mxu0 %v1524
        %2021 = vmatpush.bf16.msra.mxu0 %v1521
        %2022 = vmatpush.bf16.msra.mxu0 %v1518
        %2023 = vmatpush.bf16.msra.mxu0 %v1515
        %2024 = vmatpush.bf16.msra.mxu0 %v1512
        %2025 = vmatpush.bf16.msra.mxu0 %v1509
        %2026 = vmatmul.bf16.gmra.mxu0 %v1806
        %v2027 = vpop.f32.mrf.mxu0
        %v2028 = vadd.f32 %v1423, %v2027
        %v2029 = vpop.f32.mrf.mxu0
        %v2030 = vadd.f32 %v1423, %v2029
        %2031 = vmatmul.bf16.gmra.mxu0 %v1807
        %v2032 = vpop.f32.mrf.mxu0
        %v2033 = vadd.f32 %v1423, %v2032
        %v2034 = vpop.f32.mrf.mxu0
        %v2035 = vadd.f32 %v1423, %v2034
        %2036 = vdwg.mxu0
        %2037 = vmatpush.bf16.msra.mxu0 %v1531
        %2038 = vmatpush.bf16.msra.mxu0 %v1528
        %2039 = vmatpush.bf16.msra.mxu0 %v1525
        %2040 = vmatpush.bf16.msra.mxu0 %v1522
        %2041 = vmatpush.bf16.msra.mxu0 %v1519
        %2042 = vmatpush.bf16.msra.mxu0 %v1516
        %2043 = vmatpush.bf16.msra.mxu0 %v1513
        %2044 = vmatpush.bf16.msra.mxu0 %v1510
        %2045 = vmatmul.bf16.gmra.mxu0 %v1806
        %v2046 = vpop.f32.mrf.mxu0
        %v2047 = vadd.f32 %v1424, %v2046
        %v2048 = vpop.f32.mrf.mxu0
        %v2049 = vadd.f32 %v1424, %v2048
        %2050 = vmatmul.bf16.gmra.mxu0 %v1807
        %v2051 = vpop.f32.mrf.mxu0
        %v2052 = vadd.f32 %v1424, %v2051
        %v2053 = vpop.f32.mrf.mxu0
        %v2054 = vadd.f32 %v1424, %v2053
        %2055 = vdwg.mxu0
        %2056 = vmatpush.bf16.msra.mxu0 %v1532
        %2057 = vmatpush.bf16.msra.mxu0 %v1529
        %2058 = vmatpush.bf16.msra.mxu0 %v1526
        %2059 = vmatpush.bf16.msra.mxu0 %v1523
        %2060 = vmatpush.bf16.msra.mxu0 %v1520
        %2061 = vmatpush.bf16.msra.mxu0 %v1517
        %2062 = vmatpush.bf16.msra.mxu0 %v1514
        %2063 = vmatpush.bf16.msra.mxu0 %v1511
        %2064 = vmatmul.bf16.gmra.mxu0 %v1806
        %v2065 = vpop.f32.mrf.mxu0
        %v2066 = vadd.f32 %v1425, %v2065
        %v2067 = vpop.f32.mrf.mxu0
        %v2068 = vadd.f32 %v1425, %v2067
        %2069 = vmatmul.bf16.gmra.mxu0 %v1807
        %v2070 = vpop.f32.mrf.mxu0
        %v2071 = vadd.f32 %v1425, %v2070
        %v2072 = vpop.f32.mrf.mxu0
        %v2073 = vadd.f32 %v1425, %v2072
        %2074 = vdwg.mxu0
        %v2075 = vadd.f32 %v2006, %v2028
        %v2076 = vadd.f32 %v2009, %v2030
        %v2077 = vadd.f32 %v2012, %v2033
        %v2078 = vadd.f32 %v2015, %v2035
        %v2079 = vxor.u32 %v2075, 2147483648
        %v2080 = vxor.u32 %v2076, 2147483648
        %v2081 = vxor.u32 %v2077, 2147483648
        %v2082 = vxor.u32 %v2078, 2147483648
        %v2083 = vmul.f32 %v2079, 1.442695
        %v2084 = vpow.pop %v2083
        %v2085 = vmul.f32 %v2080, 1.442695
        %v2086 = vpow.pop %v2085
        %v2087 = vmul.f32 %v2081, 1.442695
        %v2088 = vpow.pop %v2087
        %v2089 = vmul.f32 %v2082, 1.442695
        %v2090 = vpow.pop %v2089
        %v2091 = vadd.f32 %v2084, 1.0
        %v2092 = vadd.f32 %v2086, 1.0
        %v2093 = vadd.f32 %v2088, 1.0
        %v2094 = vadd.f32 %v2090, 1.0
        %v2095 = vrcp.pop %v2091
        %v2096 = vmul.f32 %v2091, %v2095
        %v2097 = vsub.f32 1.0, %v2096
        %v2098 = vmul.f32 %v2095, %v2097
        %v2099 = vadd.f32 %v2095, %v2098
        %vm2100 = vweird.f32 %v2091
        %vm2101 = vweird.f32 %v2095
        %vm2102 = vmor %vm2100, %vm2101
        %v2103 = vsel %vm2102, %v2095, %v2099
        %v2104 = vand.u32 2147483647, %v2091
        %vm2105 = vcmp.eq.f32.partialorder %v2104, 8.507059e+37
        %v2106 = vand.u32 %v2091, 2147483648
        %v2107 = vor.u32 1.1754944e-38, %v2106
        %v2108 = vsel %vm2105, %v2107, %v2103
        %v2109 = vmul.f32 1.0, %v2108
        %v2110 = vrcp.pop %v2092
        %v2111 = vmul.f32 %v2092, %v2110
        %v2112 = vsub.f32 1.0, %v2111
        %v2113 = vmul.f32 %v2110, %v2112
        %v2114 = vadd.f32 %v2110, %v2113
        %vm2115 = vweird.f32 %v2092
        %vm2116 = vweird.f32 %v2110
        %vm2117 = vmor %vm2115, %vm2116
        %v2118 = vsel %vm2117, %v2110, %v2114
        %v2119 = vand.u32 2147483647, %v2092
        %vm2120 = vcmp.eq.f32.partialorder %v2119, 8.507059e+37
        %v2121 = vand.u32 %v2092, 2147483648
        %v2122 = vor.u32 1.1754944e-38, %v2121
        %v2123 = vsel %vm2120, %v2122, %v2118
        %v2124 = vmul.f32 1.0, %v2123
        %v2125 = vrcp.pop %v2093
        %v2126 = vmul.f32 %v2093, %v2125
        %v2127 = vsub.f32 1.0, %v2126
        %v2128 = vmul.f32 %v2125, %v2127
        %v2129 = vadd.f32 %v2125, %v2128
        %vm2130 = vweird.f32 %v2093
        %vm2131 = vweird.f32 %v2125
        %vm2132 = vmor %vm2130, %vm2131
        %v2133 = vsel %vm2132, %v2125, %v2129
        %v2134 = vand.u32 2147483647, %v2093
        %vm2135 = vcmp.eq.f32.partialorder %v2134, 8.507059e+37
        %v2136 = vand.u32 %v2093, 2147483648
        %v2137 = vor.u32 1.1754944e-38, %v2136
        %v2138 = vsel %vm2135, %v2137, %v2133
        %v2139 = vmul.f32 1.0, %v2138
        %v2140 = vrcp.pop %v2094
        %v2141 = vmul.f32 %v2094, %v2140
        %v2142 = vsub.f32 1.0, %v2141
        %v2143 = vmul.f32 %v2140, %v2142
        %v2144 = vadd.f32 %v2140, %v2143
        %vm2145 = vweird.f32 %v2094
        %vm2146 = vweird.f32 %v2140
        %vm2147 = vmor %vm2145, %vm2146
        %v2148 = vsel %vm2147, %v2140, %v2144
        %v2149 = vand.u32 2147483647, %v2094
        %vm2150 = vcmp.eq.f32.partialorder %v2149, 8.507059e+37
        %v2151 = vand.u32 %v2094, 2147483648
        %v2152 = vor.u32 1.1754944e-38, %v2151
        %v2153 = vsel %vm2150, %v2152, %v2148
        %v2154 = vmul.f32 1.0, %v2153
        %v2155 = vadd.f32 %v2007, %v2047
        %v2156 = vadd.f32 %v2010, %v2049
        %v2157 = vadd.f32 %v2013, %v2052
        %v2158 = vadd.f32 %v2016, %v2054
        %v2159 = vxor.u32 %v2155, 2147483648
        %v2160 = vxor.u32 %v2156, 2147483648
        %v2161 = vxor.u32 %v2157, 2147483648
        %v2162 = vxor.u32 %v2158, 2147483648
        %v2163 = vmul.f32 %v2159, 1.442695
        %v2164 = vpow.pop %v2163
        %v2165 = vmul.f32 %v2160, 1.442695
        %v2166 = vpow.pop %v2165
        %v2167 = vmul.f32 %v2161, 1.442695
        %v2168 = vpow.pop %v2167
        %v2169 = vmul.f32 %v2162, 1.442695
        %v2170 = vpow.pop %v2169
        %v2171 = vadd.f32 %v2164, 1.0
        %v2172 = vadd.f32 %v2166, 1.0
        %v2173 = vadd.f32 %v2168, 1.0
        %v2174 = vadd.f32 %v2170, 1.0
        %v2175 = vrcp.pop %v2171
        %v2176 = vmul.f32 %v2171, %v2175
        %v2177 = vsub.f32 1.0, %v2176
        %v2178 = vmul.f32 %v2175, %v2177
        %v2179 = vadd.f32 %v2175, %v2178
        %vm2180 = vweird.f32 %v2171
        %vm2181 = vweird.f32 %v2175
        %vm2182 = vmor %vm2180, %vm2181
        %v2183 = vsel %vm2182, %v2175, %v2179
        %v2184 = vand.u32 2147483647, %v2171
        %vm2185 = vcmp.eq.f32.partialorder %v2184, 8.507059e+37
        %v2186 = vand.u32 %v2171, 2147483648
        %v2187 = vor.u32 1.1754944e-38, %v2186
        %v2188 = vsel %vm2185, %v2187, %v2183
        %v2189 = vmul.f32 1.0, %v2188
        %v2190 = vrcp.pop %v2172
        %v2191 = vmul.f32 %v2172, %v2190
        %v2192 = vsub.f32 1.0, %v2191
        %v2193 = vmul.f32 %v2190, %v2192
        %v2194 = vadd.f32 %v2190, %v2193
        %vm2195 = vweird.f32 %v2172
        %vm2196 = vweird.f32 %v2190
        %vm2197 = vmor %vm2195, %vm2196
        %v2198 = vsel %vm2197, %v2190, %v2194
        %v2199 = vand.u32 2147483647, %v2172
        %vm2200 = vcmp.eq.f32.partialorder %v2199, 8.507059e+37
        %v2201 = vand.u32 %v2172, 2147483648
        %v2202 = vor.u32 1.1754944e-38, %v2201
        %v2203 = vsel %vm2200, %v2202, %v2198
        %v2204 = vmul.f32 1.0, %v2203
        %v2205 = vrcp.pop %v2173
        %v2206 = vmul.f32 %v2173, %v2205
        %v2207 = vsub.f32 1.0, %v2206
        %v2208 = vmul.f32 %v2205, %v2207
        %v2209 = vadd.f32 %v2205, %v2208
        %vm2210 = vweird.f32 %v2173
        %vm2211 = vweird.f32 %v2205
        %vm2212 = vmor %vm2210, %vm2211
        %v2213 = vsel %vm2212, %v2205, %v2209
        %v2214 = vand.u32 2147483647, %v2173
        %vm2215 = vcmp.eq.f32.partialorder %v2214, 8.507059e+37
        %v2216 = vand.u32 %v2173, 2147483648
        %v2217 = vor.u32 1.1754944e-38, %v2216
        %v2218 = vsel %vm2215, %v2217, %v2213
        %v2219 = vmul.f32 1.0, %v2218
        %v2220 = vrcp.pop %v2174
        %v2221 = vmul.f32 %v2174, %v2220
        %v2222 = vsub.f32 1.0, %v2221
        %v2223 = vmul.f32 %v2220, %v2222
        %v2224 = vadd.f32 %v2220, %v2223
        %vm2225 = vweird.f32 %v2174
        %vm2226 = vweird.f32 %v2220
        %vm2227 = vmor %vm2225, %vm2226
        %v2228 = vsel %vm2227, %v2220, %v2224
        %v2229 = vand.u32 2147483647, %v2174
        %vm2230 = vcmp.eq.f32.partialorder %v2229, 8.507059e+37
        %v2231 = vand.u32 %v2174, 2147483648
        %v2232 = vor.u32 1.1754944e-38, %v2231
        %v2233 = vsel %vm2230, %v2232, %v2228
        %v2234 = vmul.f32 1.0, %v2233
        %v2235 = vmul.f32 %v2109, %v2066
        %v2236 = vmul.f32 %v2124, %v2068
        %v2237 = vmul.f32 %v2139, %v2071
        %v2238 = vmul.f32 %v2154, %v2073
        %v2239 = vadd.f32 %v2008, %v2235
        %v2240 = vadd.f32 %v2011, %v2236
        %v2241 = vadd.f32 %v2014, %v2237
        %v2242 = vadd.f32 %v2017, %v2238
        %v2243 = vtanh.pop %v2239
        %v2244 = vtanh.pop %v2240
        %v2245 = vtanh.pop %v2241
        %v2246 = vtanh.pop %v2242
        %v2247 = vsub.f32 %v1802, %v2243
        %v2248 = vsub.f32 %v1803, %v2244
        %v2249 = vsub.f32 %v1804, %v2245
        %v2250 = vsub.f32 %v1805, %v2246
        %v2251 = vmul.f32 %v2189, %v2247
        %v2252 = vmul.f32 %v2204, %v2248
        %v2253 = vmul.f32 %v2219, %v2249
        %v2254 = vmul.f32 %v2234, %v2250
        %v2255 = vadd.f32 %v2243, %v2251
        %v2256 = vadd.f32 %v2244, %v2252
        %v2257 = vadd.f32 %v2245, %v2253
        %v2258 = vadd.f32 %v2246, %v2254
        %2259 = vst [vmem:[#allocation2] sm:$0xff] %v2255
        %2260 = vst [vmem:[#allocation2 + $0x8] sm:$0xff] %v2256
        %2261 = vst [vmem:[#allocation2 + $0x10] sm:$0xff] %v2257
        %2262 = vst [vmem:[#allocation2 + $0x18] sm:$0xff] %v2258
        %v2263 = vld [vmem:[#allocation2] sm:$0xff]
        %v2264 = vld [vmem:[#allocation2 + $0x8] sm:$0xff]
        %v2265 = vld [vmem:[#allocation2 + $0x10] sm:$0xff]
        %v2266 = vld [vmem:[#allocation2 + $0x18] sm:$0xff]
        %v2267 = vmul.f32 %v2263, %v2263
        %v2268 = vmul.f32 %v2264, %v2264
        %v2269 = vmul.f32 %v2265, %v2265
        %v2270 = vmul.f32 %v2266, %v2266
        %2271 = vadd.xlane.f32.xlu0 %v2267
        %v2272 = vpop.xlane.xlu0 %2271
        %2273 = vadd.xlane.f32.xlu0 %v2268
        %v2274 = vpop.xlane.xlu0 %2273
        %2275 = vadd.xlane.f32.xlu0 %v2269
        %v2276 = vpop.xlane.xlu0 %2275
        %2277 = vadd.xlane.f32.xlu0 %v2270
        %v2278 = vpop.xlane.xlu0 %2277
        %v2279 = vmax.f32 %v2272, 1e-24
        %v2280 = vmax.f32 %v2274, 1e-24
        %v2281 = vmax.f32 %v2276, 1e-24
        %v2282 = vmax.f32 %v2278, 1e-24
        %v2283 = vrsqrt.pop %v2279
        %v2284 = vmul.f32 %v2283, %v2279
        %v2285 = vmul.f32 %v2284, %v2283
        %v2286 = vmul.f32 0.5, %v2285
        %v2287 = vsub.f32 1.5, %v2286
        %v2288 = vmul.f32 %v2283, %v2287
        %vm2289 = vweird.f32 %v2279
        %vm2290 = vweird.f32 %v2283
        %vm2291 = vmor %vm2289, %vm2290
        %v2292 = vsel %vm2291, %v2283, %v2288
        %v2293 = vrsqrt.pop %v2280
        %v2294 = vmul.f32 %v2293, %v2280
        %v2295 = vmul.f32 %v2294, %v2293
        %v2296 = vmul.f32 0.5, %v2295
        %v2297 = vsub.f32 1.5, %v2296
        %v2298 = vmul.f32 %v2293, %v2297
        %vm2299 = vweird.f32 %v2280
        %vm2300 = vweird.f32 %v2293
        %vm2301 = vmor %vm2299, %vm2300
        %v2302 = vsel %vm2301, %v2293, %v2298
        %v2303 = vrsqrt.pop %v2281
        %v2304 = vmul.f32 %v2303, %v2281
        %v2305 = vmul.f32 %v2304, %v2303
        %v2306 = vmul.f32 0.5, %v2305
        %v2307 = vsub.f32 1.5, %v2306
        %v2308 = vmul.f32 %v2303, %v2307
        %vm2309 = vweird.f32 %v2281
        %vm2310 = vweird.f32 %v2303
        %vm2311 = vmor %vm2309, %vm2310
        %v2312 = vsel %vm2311, %v2303, %v2308
        %v2313 = vrsqrt.pop %v2282
        %v2314 = vmul.f32 %v2313, %v2282
        %v2315 = vmul.f32 %v2314, %v2313
        %v2316 = vmul.f32 0.5, %v2315
        %v2317 = vsub.f32 1.5, %v2316
        %v2318 = vmul.f32 %v2313, %v2317
        %vm2319 = vweird.f32 %v2282
        %vm2320 = vweird.f32 %v2313
        %vm2321 = vmor %vm2319, %vm2320
        %v2322 = vsel %vm2321, %v2313, %v2318
        %v2323 = vmul.f32 %v2263, %v2292
        %v2324 = vmul.f32 %v2264, %v2302
        %v2325 = vmul.f32 %v2265, %v2312
        %v2326 = vmul.f32 %v2266, %v2322
        %2327 = vst [vmem:[%s624] sm:$0xff] %v2323
        %2328 = vst [vmem:[%s624 + $0x8] sm:$0xff] %v2324
        %2329 = vst [vmem:[%s624 + $0x10] sm:$0xff] %v2325
        %2330 = vst [vmem:[%s624 + $0x18] sm:$0xff] %v2326
        %s2331 = sand.u32 %s311, 1
        %s2332 = scalar_lea.sflag [#allocation5], %s2331
        %s2333 = sand.u32 %s311, 1
        %s2334 = smul.addr %s2333, 32
        %s2335 = scalar_lea.vmem [#allocation20], %s2334
        // Predicated region
        $region109: #{tpu_custom_call.1} parent=67 // pred_check
          %p2336 = pneg %p321
        $region110: #{tpu_custom_call.1} parent=67 // pred_check_branch
          %2338 = sbr.rel (%p2336) target = $region112
        $region111: #{tpu_custom_call.1} parent=67 // pred_region
          %2340 = vsyncadd %s2332, 0
          %s2341 = smul.addr %s36, 4
          %s2342 = smul.addr %s2341, 8
          %s2343 = scalar_lea.hbm %s12, %s2342
          %s2344 = sshll.u32 %s2335, 4
          %s2345 = int_to_ptr.vmem [resolvable:$true] %s2344
          %s2346 = sshll.u32 %s2343, 4
          %s2347 = int_to_ptr.hbm [resolvable:$true] %s2346
          %2352 = dma.vmem_to_hbm [thread:$0]  %s2345, 512, %s2347, %s2332, 128, 128, 8
        $region112: #{tpu_custom_call.1} parent=67 // pred_fallthru
          _
      $region68: #{tpu_custom_call.1} parent=5 // pred_fallthru
        _
      %p2353 = scmp.le.s32.totalorder 2, %s31
      // Predicated region
      $region113: #{tpu_custom_call.1} parent=5 // pred_check
        %p2354 = pneg %p2353
      $region114: #{tpu_custom_call.1} parent=5 // pred_check_branch
        %2356 = sbr.rel (%p2354) target = $region116
      $region115: #{tpu_custom_call.1} parent=5 // pred_region
        %s2357 = ssub.s32 %s31, 2
        // Predicated region
        $region117: #{tpu_custom_call.1} parent=115 // pred_check
          %p2358 = pneg %p327
        $region118: #{tpu_custom_call.1} parent=115 // pred_check_branch
          %2360 = sbr.rel (%p2358) target = $region120
        $region119: #{tpu_custom_call.1} parent=115 // pred_region
          %s2361 = sand.u32 %s312, 1
          %s2362 = scalar_lea.sflag [#allocation5], %s2361
          %s2363 = sand.u32 %s312, 1
          %s2364 = smul.addr %s2363, 32
          %s2365 = scalar_lea.vmem [#allocation20], %s2364
          %2367 = dma.done %s2362, 512
        $region120: #{tpu_custom_call.1} parent=115 // pred_fallthru
          _
      $region116: #{tpu_custom_call.1} parent=5 // pred_fallthru
        _
    $region6: #{tpu_custom_call.1} parent=1 // loop_footer
      %s35 = sadd.s32 1, %s31
    $region7: #{tpu_custom_call.1} parent=1 // loop_footer_branch
      %30 = sbr.rel target = $region3
    $region8: #{tpu_custom_call.1} parent=1 // loop_exit
      _
    %2368 = vsyncpa [#allocation4], 1
    %s2369 = scalar_lea.sflag [#allocation4], 1
    %2370 = vsyncpa %s2369, 1
    %2371 = vsyncpa [#allocation7], 1
    %s2372 = scalar_lea.sflag [#allocation7], 1
    %2373 = vsyncpa %s2372, 1
    %2374 = vsyncpa [#allocation10], 1
    %2375 = vsyncpa [#allocation13], 1
    %2376 = vsyncpa [#allocation16], 1
    %2377 = vsyncpa [#allocation19], 1
    %2378 = vsyncpa [#allocation5], 1
    %s2379 = scalar_lea.sflag [#allocation5], 1
    %2380 = vsyncpa %s2379, 1

</llo_original>
